<compile_context>
chip_gen: v6e
topology: v6e:2x2x1
jax: 0.10.0
libtpu: 0.0.40
codegen_flags: <defaults>
</compile_context>

<pallas_src>
import functools

import jax
import jax.numpy as jnp
import numpy as np
from jax.experimental import pallas as pl
from jax.experimental.pallas import tpu as pltpu

BN_EPS = 1e-3
LANE = 128


def _round_up(x, m):
    return ((x + m - 1) // m) * m


def _compute_pad(k, s, dim):
    # Mirrors Unit3D.compute_pad exactly.
    if dim % s == 0:
        return max(k - s, 0)
    return max(k - dim % s, 0)


def _conv_stats_kernel(p_ref, w_ref, y_ref, stats_ref, acc_ref):
    """Pass 1: conv-as-matmul + per-M-tile BN partial statistics.

    p_ref:     (tm, tk)       im2col patches tile (compute dtype)
    w_ref:     (tk, O_pad)    conv weight tile (resident across M tiles)
    y_ref:     (tm, O_pad)    conv output tile (f32)
    stats_ref: (1, 8, O_pad)  row 0 = sum over rows, row 1 = sum of squares
    acc_ref:   (tm, O_pad)    f32 accumulator scratch
    """
    k = pl.program_id(1)

    @pl.when(k == 0)
    def _():
        acc_ref[...] = jnp.zeros_like(acc_ref)

    acc_ref[...] += jnp.dot(p_ref[...], w_ref[...],
                            preferred_element_type=jnp.float32)

    @pl.when(k == pl.num_programs(1) - 1)
    def _():
        acc = acc_ref[...]
        y_ref[...] = acc
        s = jnp.sum(acc, axis=0, keepdims=True)        # (1, O_pad)
        q = jnp.sum(acc * acc, axis=0, keepdims=True)  # (1, O_pad)
        row_id = jax.lax.broadcasted_iota(jnp.int32, (8, acc.shape[1]), 0)
        stats_ref[0] = jnp.where(row_id == 0, s,
                                 jnp.where(row_id == 1, q, 0.0))


def _bn_relu_kernel(y_ref, scale_ref, bias_ref, o_ref):
    # Pass 2: y * scale + bias, ReLU  (scale/bias precomputed outside).
    o_ref[...] = jnp.maximum(y_ref[...] * scale_ref[...] + bias_ref[...], 0.0)


@functools.partial(
    jax.jit, static_argnames=("kernel_shape", "stride", "compute_dtype"))
def unit3d_forward(x, weight, gamma, beta, *, kernel_shape, stride,
                   compute_dtype=jnp.bfloat16):
    """x: (N, C, T, H, W) f32. weight: (O, C, kt, kh, kw). -> (N, O, oT, oH, oW)."""
    N, C, T, H, W = x.shape
    O = weight.shape[0]
    kt, kh, kw = kernel_shape
    st, sh, sw = stride

    out_t = -(-T // st)
    out_h = -(-H // sh)
    out_w = -(-W // sw)

    pad_t = _compute_pad(kt, st, T)
    pad_h = _compute_pad(kh, sh, H)
    pad_w = _compute_pad(kw, sw, W)

    # Channel-last layout so the im2col reshape is layout-free.
    x_cl = jnp.transpose(x, (0, 2, 3, 4, 1)).astype(jnp.float32)
    x_pad = jnp.pad(
        x_cl,
        ((0, 0),
         (pad_t // 2, pad_t - pad_t // 2),
         (pad_h // 2, pad_h - pad_h // 2),
         (pad_w // 2, pad_w - pad_w // 2),
         (0, 0)))

    taps = []
    for i in range(kt):
        for j in range(kh):
            for k in range(kw):
                taps.append(
                    x_pad[:, i:i + out_t * st:st, j:j + out_h * sh:sh,
                          k:k + out_w * sw:sw, :])     # (N, oT, oH, oW, C)
    patches = jnp.concatenate(taps, axis=-1)            # cols ordered (tap, c)

    M = N * out_t * out_h * out_w
    K = C * kt * kh * kw
    patches = patches.reshape(M, K)
    # Match the (kt, kh, kw, c) column order of the patches.
    w2d = jnp.transpose(weight, (0, 2, 3, 4, 1)).reshape(O, K).T  # (K, O)

    # ---- pad to MXU / lane-friendly sizes --------------------------------
    O_pad = _round_up(O, LANE)
    tm = min(256, _round_up(M, 8))
    M_pad = _round_up(M, tm)
    K_al = _round_up(K, LANE)
    tk = min(512, K_al)
    K_pad = _round_up(K_al, tk)
    n_m = M_pad // tm
    n_k = K_pad // tk

    patches_p = jnp.pad(patches.astype(compute_dtype),
                        ((0, M_pad - M), (0, K_pad - K)))
    w_p = jnp.pad(w2d.astype(compute_dtype),
                  ((0, K_pad - K), (0, O_pad - O)))

    itemsize = jnp.dtype(compute_dtype).itemsize
    flops = 2 * M_pad * K_pad * O_pad
    bytes_accessed = (M_pad * K_pad * itemsize            # patches stream
                      + n_m * K_pad * O_pad * itemsize    # weight re-reads
                      + M_pad * O_pad * 4                 # y writeback
                      + n_m * 8 * O_pad * 4)              # partial stats

    # ---- pass 1: tiled matmul + per-tile BN partials ---------------------
    y_f32, stats = pl.pallas_call(
        _conv_stats_kernel,
        out_shape=(
            jax.ShapeDtypeStruct((M_pad, O_pad), jnp.float32),
            jax.ShapeDtypeStruct((n_m, 8, O_pad), jnp.float32),
        ),
        grid_spec=pltpu.PrefetchScalarGridSpec(
            num_scalar_prefetch=0,
            grid=(n_m, n_k),
            in_specs=[
                pl.BlockSpec((tm, tk), lambda m, k: (m, k)),
                pl.BlockSpec((tk, O_pad), lambda m, k: (k, 0)),
            ],
            out_specs=(
                pl.BlockSpec((tm, O_pad), lambda m, k: (m, 0)),
                pl.BlockSpec((1, 8, O_pad), lambda m, k: (m, 0, 0)),
            ),
            scratch_shapes=[pltpu.VMEM((tm, O_pad), jnp.float32)],
        ),
        compiler_params=pltpu.CompilerParams(
            dimension_semantics=("parallel", "arbitrary"),
            vmem_limit_bytes=32 * 1024 * 1024,
        ),
        cost_estimate=pl.CostEstimate(
            flops=flops, transcendentals=0, bytes_accessed=bytes_accessed),
    )(patches_p, w_p)

    # ---- tiny global BN reduction (plain JAX) -----------------------------
    # Padded rows are zero, so dividing by the true M keeps stats exact.
    inv_m = 1.0 / float(M)
    mean = jnp.sum(stats[:, 0, :], axis=0) * inv_m          # (O_pad,)
    ex2 = jnp.sum(stats[:, 1, :], axis=0) * inv_m
    var = jnp.maximum(ex2 - mean * mean, 0.0)
    gamma_p = jnp.pad(gamma.astype(jnp.float32), (0, O_pad - O))
    beta_p = jnp.pad(beta.astype(jnp.float32), (0, O_pad - O))
    scale = gamma_p * jax.lax.rsqrt(var + BN_EPS)
    bias = beta_p - mean * scale
    scale2d = scale.reshape(1, O_pad)
    bias2d = bias.reshape(1, O_pad)

    # ---- pass 2: fused scale/bias + ReLU ----------------------------------
    out_p = pl.pallas_call(
        _bn_relu_kernel,
        out_shape=jax.ShapeDtypeStruct((M_pad, O_pad), jnp.float32),
        grid_spec=pltpu.PrefetchScalarGridSpec(
            num_scalar_prefetch=0,
            grid=(n_m,),
            in_specs=[
                pl.BlockSpec((tm, O_pad), lambda m: (m, 0)),
                pl.BlockSpec((1, O_pad), lambda m: (0, 0)),
                pl.BlockSpec((1, O_pad), lambda m: (0, 0)),
            ],
            out_specs=pl.BlockSpec((tm, O_pad), lambda m: (m, 0)),
        ),
        compiler_params=pltpu.CompilerParams(
            dimension_semantics=("parallel",),
            vmem_limit_bytes=32 * 1024 * 1024,
        ),
    )(y_f32, scale2d, bias2d)

    out = out_p[:M, :O].reshape(N, out_t, out_h, out_w, O)
    return jnp.transpose(out, (0, 4, 1, 2, 3)).astype(x.dtype)


def _reference(x, weight, gamma, beta, *, kernel_shape, stride):
    """Pure-JAX reference mirroring the PyTorch forward (training-mode BN)."""
    N, C, T, H, W = x.shape
    kt, kh, kw = kernel_shape
    st, sh, sw = stride
    pad_t = _compute_pad(kt, st, T)
    pad_h = _compute_pad(kh, sh, H)
    pad_w = _compute_pad(kw, sw, W)
    x_pad = jnp.pad(
        x,
        ((0, 0), (0, 0),
         (pad_t // 2, pad_t - pad_t // 2),
         (pad_h // 2, pad_h - pad_h // 2),
         (pad_w // 2, pad_w - pad_w // 2)))
    y = jax.lax.conv_general_dilated(
        x_pad, weight, window_strides=(st, sh, sw), padding="VALID",
        dimension_numbers=("NCDHW", "OIDHW", "NCDHW"))
    mean = jnp.mean(y, axis=(0, 2, 3, 4), keepdims=True)
    var = jnp.mean(jnp.square(y - mean), axis=(0, 2, 3, 4), keepdims=True)
    y = (y - mean) * jax.lax.rsqrt(var + BN_EPS)
    y = y * gamma.reshape(1, -1, 1, 1, 1) + beta.reshape(1, -1, 1, 1, 1)
    return jnp.maximum(y, 0.0)


if __name__ == "__main__":
    # Small shapes consistent with Unit3D: batch=2, in_channels=4,
    # t=4, h=w=8, output_channels=32, kernel_shape=(3,3,3), stride=(1,1,1).
    N, C, T, H, W = 2, 4, 4, 8, 8
    O = 32
    kernel_shape = (3, 3, 3)
    stride = (1, 1, 1)

    key = jax.random.PRNGKey(0)
    kx, kw_ = jax.random.split(key)
    x = jax.random.normal(kx, (N, C, T, H, W), dtype=jnp.float32)
    # Conv weight ~ Normal(0, 0.01) as in __init__; use_bias=False (default).
    weight = 0.01 * jax.random.normal(
        kw_, (O, C) + kernel_shape, dtype=jnp.float32)
    # BatchNorm3d default-initialized affine params.
    gamma = jnp.ones((O,), dtype=jnp.float32)
    beta = jnp.zeros((O,), dtype=jnp.float32)

    ref = jax.block_until_ready(_reference(
        x, weight, gamma, beta, kernel_shape=kernel_shape, stride=stride))

    # f32-fed path: tight tolerance.
    out_f32 = jax.block_until_ready(unit3d_forward(
        x, weight, gamma, beta, kernel_shape=kernel_shape, stride=stride,
        compute_dtype=jnp.float32))
    assert out_f32.shape == (N, O, T, H, W), out_f32.shape
    np.testing.assert_allclose(
        np.asarray(out_f32), np.asarray(ref), rtol=2e-3, atol=2e-3)

    # bf16-fed MXU path (default, f32 accumulation): looser tolerance.
    out_bf16 = jax.block_until_ready(unit3d_forward(
        x, weight, gamma, beta, kernel_shape=kernel_shape, stride=stride))
    assert out_bf16.shape == (N, O, T, H, W), out_bf16.shape
    np.testing.assert_allclose(
        np.asarray(out_bf16), np.asarray(ref), rtol=2e-2, atol=2e-2)

    print("KERNEL_OK")
</pallas_src>

<mosaic_0001>
module attributes {stable_mosaic.version = 11 : i64} {
  func.func @_conv_stats_kernel(%arg0: i32, %arg1: i32, %arg2: memref<256x128xf32, #tpu.memory_space<vmem>>, %arg3: memref<128x128xf32, #tpu.memory_space<vmem>>, %arg4: memref<256x128xf32, #tpu.memory_space<vmem>>, %arg5: memref<1x8x128xf32, #tpu.memory_space<vmem>>, %arg6: memref<256x128xf32, #tpu.memory_space<vmem>>) attributes {dimension_semantics = [#tpu.dimension_semantics<parallel>, #tpu.dimension_semantics<arbitrary>], iteration_bounds = array<i64: 2, 1>, scalar_prefetch = 0 : i64, scratch_operands = 1 : i64, tpu.core_type = #tpu.core_type<tc>, window_params = [{transform_indices = @transform_0, window_bounds = array<i64: 256, 128>}, {transform_indices = @transform_1, window_bounds = array<i64: 128, 128>}, {transform_indices = @transform_2, window_bounds = array<i64: 256, 128>}, {transform_indices = @transform_3, window_bounds = array<i64: 1, 8, 128>}]} {
    %c0_i32 = arith.constant 0 : i32
    %0 = arith.cmpi eq, %arg1, %c0_i32 : i32
    %1 = arith.extui %0 : i1 to i32
    %c0_i32_0 = arith.constant 0 : i32
    %2 = arith.cmpi ne, %1, %c0_i32_0 : i32
    scf.if %2 {
      %cst_10 = arith.constant 0.000000e+00 : f32
      %12 = vector.broadcast %cst_10 : f32 to vector<256x128xf32>
      %c0_11 = arith.constant 0 : index
      %c0_12 = arith.constant 0 : index
      %13 = vector.load %arg6[%c0_11, %c0_12] : memref<256x128xf32, #tpu.memory_space<vmem>>, vector<256x128xf32>
      tpu.vector_store %arg6[%c0_11, %c0_12], %12 {strides = array<i32>} : memref<256x128xf32, #tpu.memory_space<vmem>>, vector<256x128xf32>,
    } else {
    }
    %c0 = arith.constant 0 : index
    %c0_1 = arith.constant 0 : index
    %3 = vector.load %arg6[%c0, %c0_1] : memref<256x128xf32, #tpu.memory_space<vmem>>, vector<256x128xf32>
    %c0_2 = arith.constant 0 : index
    %c0_3 = arith.constant 0 : index
    %4 = vector.load %arg2[%c0_2, %c0_3] : memref<256x128xf32, #tpu.memory_space<vmem>>, vector<256x128xf32>
    %c0_4 = arith.constant 0 : index
    %c0_5 = arith.constant 0 : index
    %5 = vector.load %arg3[%c0_4, %c0_5] : memref<128x128xf32, #tpu.memory_space<vmem>>, vector<128x128xf32>
    %cst = arith.constant dense<0.000000e+00> : vector<256x128xf32>
    %6 = tpu.matmul %4, %5, %cst {dimension_numbers = #tpu.dot_dimension_numbers<[1], [0], [0], [1], [0, 0, 1, 1], [], []>} : vector<256x128xf32>, vector<128x128xf32>, vector<256x128xf32> -> vector<256x128xf32>
    %7 = arith.addf %3, %6 : vector<256x128xf32>
    %c0_6 = arith.constant 0 : index
    %c0_7 = arith.constant 0 : index
    %8 = vector.load %arg6[%c0_6, %c0_7] : memref<256x128xf32, #tpu.memory_space<vmem>>, vector<256x128xf32>
    tpu.vector_store %arg6[%c0_6, %c0_7], %7 {strides = array<i32>} : memref<256x128xf32, #tpu.memory_space<vmem>>, vector<256x128xf32>,
    %c0_i32_8 = arith.constant 0 : i32
    %9 = arith.cmpi eq, %arg1, %c0_i32_8 : i32
    %10 = arith.extui %9 : i1 to i32
    %c0_i32_9 = arith.constant 0 : i32
    %11 = arith.cmpi ne, %10, %c0_i32_9 : i32
    scf.if %11 {
      %c0_10 = arith.constant 0 : index
      %c0_11 = arith.constant 0 : index
      %12 = vector.load %arg6[%c0_10, %c0_11] : memref<256x128xf32, #tpu.memory_space<vmem>>, vector<256x128xf32>
      %c0_12 = arith.constant 0 : index
      %c0_13 = arith.constant 0 : index
      %13 = vector.load %arg4[%c0_12, %c0_13] : memref<256x128xf32, #tpu.memory_space<vmem>>, vector<256x128xf32>
      tpu.vector_store %arg4[%c0_12, %c0_13], %12 {strides = array<i32>} : memref<256x128xf32, #tpu.memory_space<vmem>>, vector<256x128xf32>,
      %cst_14 = arith.constant dense<0.000000e+00> : vector<128xf32>
      %14 = vector.multi_reduction <add>, %12, %cst_14 [0] : vector<256x128xf32> to vector<128xf32>
      %15 = vector.shape_cast %14 : vector<128xf32> to vector<1x128xf32>
      %16 = arith.mulf %12, %12 : vector<256x128xf32>
      %cst_15 = arith.constant dense<0.000000e+00> : vector<128xf32>
      %17 = vector.multi_reduction <add>, %16, %cst_15 [0] : vector<256x128xf32> to vector<128xf32>
      %18 = vector.shape_cast %17 : vector<128xf32> to vector<1x128xf32>
      %19 = tpu.iota {dimensions = array<i32: 0>} : vector<8x128xi32>
      %c0_i32_16 = arith.constant 0 : i32
      %20 = vector.broadcast %c0_i32_16 : i32 to vector<8x128xi32>
      %21 = arith.cmpi eq, %19, %20 : vector<8x128xi32>
      %c1_i32 = arith.constant 1 : i32
      %22 = vector.broadcast %c1_i32 : i32 to vector<8x128xi32>
      %23 = arith.cmpi eq, %19, %22 : vector<8x128xi32>
      %cst_17 = arith.constant 0.000000e+00 : f32
      %24 = vector.shape_cast %18 : vector<1x128xf32> to vector<1x128xf32>
      %25 = vector.broadcast %24 : vector<1x128xf32> to vector<8x128xf32>
      %26 = vector.broadcast %cst_17 : f32 to vector<8x128xf32>
      %27 = arith.select %23, %25, %26 : vector<8x128xi1>, vector<8x128xf32>
      %28 = vector.shape_cast %15 : vector<1x128xf32> to vector<1x128xf32>
      %29 = vector.broadcast %28 : vector<1x128xf32> to vector<8x128xf32>
      %30 = arith.select %21, %29, %27 : vector<8x128xi1>, vector<8x128xf32>
      %c0_18 = arith.constant 0 : index
      %c0_19 = arith.constant 0 : index
      %c0_20 = arith.constant 0 : index
      %31 = vector.load %arg5[%c0_18, %c0_19, %c0_20] : memref<1x8x128xf32, #tpu.memory_space<vmem>>, vector<1x8x128xf32>
      %32 = vector.shape_cast %31 : vector<1x8x128xf32> to vector<8x128xf32>
      %33 = vector.shape_cast %30 : vector<8x128xf32> to vector<1x8x128xf32>
      tpu.vector_store %arg5[%c0_18, %c0_19, %c0_20], %33 {strides = array<i32>} : memref<1x8x128xf32, #tpu.memory_space<vmem>>, vector<1x8x128xf32>,
    } else {
    }
    return
  }
  func.func @transform_0(%arg0: i32, %arg1: i32) -> (i32, i32) {
    %c0_i32 = arith.constant 0 : i32
    return %arg0, %arg1 : i32, i32
  }
  func.func @transform_1(%arg0: i32, %arg1: i32) -> (i32, i32) {
    %c0_i32 = arith.constant 0 : i32
    %c0_i32_0 = arith.constant 0 : i32
    return %arg1, %c0_i32 : i32, i32
  }
  func.func @transform_2(%arg0: i32, %arg1: i32) -> (i32, i32) {
    %c0_i32 = arith.constant 0 : i32
    %c0_i32_0 = arith.constant 0 : i32
    return %arg0, %c0_i32 : i32, i32
  }
  func.func @transform_3(%arg0: i32, %arg1: i32) -> (i32, i32, i32) {
    %c0_i32 = arith.constant 0 : i32
    %c0_i32_0 = arith.constant 0 : i32
    %c0_i32_1 = arith.constant 0 : i32
    return %arg0, %c0_i32, %c0_i32_0 : i32, i32, i32
  }
}

module attributes {stable_mosaic.version = 11 : i64} {
  func.func @_bn_relu_kernel(%arg0: i32, %arg1: memref<256x128xf32, #tpu.memory_space<vmem>>, %arg2: memref<1x128xf32, #tpu.memory_space<vmem>>, %arg3: memref<1x128xf32, #tpu.memory_space<vmem>>, %arg4: memref<256x128xf32, #tpu.memory_space<vmem>>) attributes {dimension_semantics = [#tpu.dimension_semantics<parallel>], iteration_bounds = array<i64: 2>, scalar_prefetch = 0 : i64, scratch_operands = 0 : i64, tpu.core_type = #tpu.core_type<tc>, window_params = [{transform_indices = @transform_0, window_bounds = array<i64: 256, 128>}, {pipeline_mode = #tpu.pipeline_mode<synchronous>, transform_indices = @transform_1, window_bounds = array<i64: 1, 128>}, {pipeline_mode = #tpu.pipeline_mode<synchronous>, transform_indices = @transform_2, window_bounds = array<i64: 1, 128>}, {transform_indices = @transform_3, window_bounds = array<i64: 256, 128>}]} {
    %c0 = arith.constant 0 : index
    %c0_0 = arith.constant 0 : index
    %0 = vector.load %arg1[%c0, %c0_0] : memref<256x128xf32, #tpu.memory_space<vmem>>, vector<256x128xf32>
    %c0_1 = arith.constant 0 : index
    %c0_2 = arith.constant 0 : index
    %1 = vector.load %arg2[%c0_1, %c0_2] : memref<1x128xf32, #tpu.memory_space<vmem>>, vector<1x128xf32>
    %2 = vector.broadcast %1 : vector<1x128xf32> to vector<256x128xf32>
    %3 = arith.mulf %0, %2 : vector<256x128xf32>
    %c0_3 = arith.constant 0 : index
    %c0_4 = arith.constant 0 : index
    %4 = vector.load %arg3[%c0_3, %c0_4] : memref<1x128xf32, #tpu.memory_space<vmem>>, vector<1x128xf32>
    %5 = vector.broadcast %4 : vector<1x128xf32> to vector<256x128xf32>
    %6 = arith.addf %3, %5 : vector<256x128xf32>
    %cst = arith.constant 0.000000e+00 : f32
    %7 = vector.broadcast %cst : f32 to vector<256x128xf32>
    %8 = arith.maximumf %6, %7 : vector<256x128xf32>
    %c0_5 = arith.constant 0 : index
    %c0_6 = arith.constant 0 : index
    %9 = vector.load %arg4[%c0_5, %c0_6] : memref<256x128xf32, #tpu.memory_space<vmem>>, vector<256x128xf32>
    tpu.vector_store %arg4[%c0_5, %c0_6], %8 {strides = array<i32>} : memref<256x128xf32, #tpu.memory_space<vmem>>, vector<256x128xf32>,
    return
  }
  func.func @transform_0(%arg0: i32) -> (i32, i32) {
    %c0_i32 = arith.constant 0 : i32
    %c0_i32_0 = arith.constant 0 : i32
    return %arg0, %c0_i32 : i32, i32
  }
  func.func @transform_1(%arg0: i32) -> (i32, i32) {
    %c0_i32 = arith.constant 0 : i32
    %c0_i32_0 = arith.constant 0 : i32
    %c0_i32_1 = arith.constant 0 : i32
    return %c0_i32, %c0_i32_0 : i32, i32
  }
  func.func @transform_2(%arg0: i32) -> (i32, i32) {
    %c0_i32 = arith.constant 0 : i32
    %c0_i32_0 = arith.constant 0 : i32
    %c0_i32_1 = arith.constant 0 : i32
    return %c0_i32, %c0_i32_0 : i32, i32
  }
  func.func @transform_3(%arg0: i32) -> (i32, i32) {
    %c0_i32 = arith.constant 0 : i32
    %c0_i32_0 = arith.constant 0 : i32
    return %arg0, %c0_i32 : i32, i32
  }
}

</mosaic_0001>

<llo_original>
// kernel: unit3d_forward.3
$region0: #{unit3d_forward.3}
  #allocation0 [shape = 'u32[]', space=smem, size = 0x4, offset = 0x4, fixed_abs, tag = 'smem constant byte address 0x4 - core index']
  #allocation1 [shape = 'u32[144,128]{1,0:T(1,128)}', space=vmem, size = 0x12000, scoped, tag = 'internal scratch']
  %s0 = inlined_call_operand.vmem [shape: f32[512,128], index: 0, kind: input, shape index: {}]
  %s1 = inlined_call_operand.vmem [shape: f32[1,128], index: 1, kind: input, shape index: {}]
  %s2 = inlined_call_operand.vmem [shape: f32[1,128], index: 2, kind: input, shape index: {}]
  %s3 = inlined_call_operand.hbm [shape: f32[512,128], index: 3, kind: output, shape index: {}]
  %s4 = sld [smem:[#allocation0]]
  $region45: #{unit3d_forward.3} parent=0
    _
  %s6 = ssub.s32 1, %s4
  %s7 = scalar_select 0, %s6, %s4
  $region1: #{unit3d_forward.3} parent=0
    #allocation2 [shape = 'u8[262144]{0}', space=vmem, size = 0x40000, scoped, tag = 'output window, operand 0']
    #allocation3 [shape = 's32[2]{0}', space=sflag, size = 0x8, scoped, tag = 'scoped memory for unit3d_forward.3']
    %8 = vsyncpa [#allocation3], 0
    %s9 = scalar_lea.sflag [#allocation3], 1
    %10 = vsyncpa %s9, 0
    loop: start=0, step=1, limit=4
    $region2: #{unit3d_forward.3} parent=1 // loop_pre_header
      _
    $region3: #{unit3d_forward.3} parent=1 // loop_header
      %s12 = sphi 0, %s16
      %p13 = scmp.ge.s32.totalorder %s12, 4
      %s22 = sphi 0, %s24
      %s25 = sphi 0, %s22
      %s26 = sphi 0, %s25
      %s42 = sphi 0, %s26
      %s46 = sphi 0, %s46
      %s48 = sphi 0, %s46
      %s49 = sphi 0, %s48
      %s63 = sphi 0, %s49
      %s67 = sphi 0, %s67
      %s69 = sphi 0, %s67
      %s70 = sphi 0, %s69
      %s84 = sphi 0, %s70
      %s90 = sphi 0, %s92
      %s93 = sphi 0, %s90
      %s94 = sphi 0, %s93
      %s110 = sphi 0, %s94
    $region4: #{unit3d_forward.3} parent=1 // loop_header_branch
      %15 = sbr.rel (%p13) target = $region8
    $region5: #{unit3d_forward.3} parent=1 // loop_body
      %s17 = ssub.s32 %s12, 1
      %s18 = ssub.s32 %s12, 2
      %s19 = sadd.s32 %s12, 1
      %s20 = ssub.s32 %s12, %s19
      %p21 = scmp.eq.s32.totalorder %s20, 0
      %s23 = sadd.s32 %s22, 1
      %s24 = scalar_select %p21, %s22, %s23
      %p27 = pneg %p21
      %p28 = scmp.eq.s32.totalorder %s12, 1
      %p29 = por %p27, %p28
      %p30 = scmp.ne.s32.totalorder %s22, %s25
      %p31 = scmp.eq.s32.totalorder %s12, 0
      %p32 = por %p30, %p31
      %p33 = scmp.ne.s32.totalorder %s22, %s25
      %p34 = scmp.eq.s32.totalorder %s17, 1
      %p35 = por %p33, %p34
      %p36 = scmp.ne.s32.totalorder %s25, %s26
      %p37 = scmp.eq.s32.totalorder %s17, 0
      %p38 = por %p36, %p37
      %p39 = scmp.ne.s32.totalorder %s25, %s26
      %p40 = scmp.eq.s32.totalorder %s18, 1
      %p41 = por %p39, %p40
      %p43 = scmp.ne.s32.totalorder %s26, %s42
      %p44 = scmp.eq.s32.totalorder %s18, 0
      %p45 = por %p43, %p44
      %s47 = sadd.s32 %s46, 1
      %p50 = scmp.eq.s32.totalorder %s12, 1
      %p51 = scmp.ne.s32.totalorder %s46, %s48
      %p52 = scmp.eq.s32.totalorder %s12, 0
      %p53 = por %p51, %p52
      %p54 = scmp.ne.s32.totalorder %s46, %s48
      %p55 = scmp.eq.s32.totalorder %s17, 1
      %p56 = por %p54, %p55
      %p57 = scmp.ne.s32.totalorder %s48, %s49
      %p58 = scmp.eq.s32.totalorder %s17, 0
      %p59 = por %p57, %p58
      %p60 = scmp.ne.s32.totalorder %s48, %s49
      %p61 = scmp.eq.s32.totalorder %s18, 1
      %p62 = por %p60, %p61
      %p64 = scmp.ne.s32.totalorder %s49, %s63
      %p65 = scmp.eq.s32.totalorder %s18, 0
      %p66 = por %p64, %p65
      %s68 = sadd.s32 %s67, 1
      %p71 = scmp.eq.s32.totalorder %s12, 1
      %p72 = scmp.ne.s32.totalorder %s67, %s69
      %p73 = scmp.eq.s32.totalorder %s12, 0
      %p74 = por %p72, %p73
      %p75 = scmp.ne.s32.totalorder %s67, %s69
      %p76 = scmp.eq.s32.totalorder %s17, 1
      %p77 = por %p75, %p76
      %p78 = scmp.ne.s32.totalorder %s69, %s70
      %p79 = scmp.eq.s32.totalorder %s17, 0
      %p80 = por %p78, %p79
      %p81 = scmp.ne.s32.totalorder %s69, %s70
      %p82 = scmp.eq.s32.totalorder %s18, 1
      %p83 = por %p81, %p82
      %p85 = scmp.ne.s32.totalorder %s70, %s84
      %p86 = scmp.eq.s32.totalorder %s18, 0
      %p87 = por %p85, %p86
      %s88 = ssub.s32 %s12, %s19
      %p89 = scmp.eq.s32.totalorder %s88, 0
      %s91 = sadd.s32 %s90, 1
      %s92 = scalar_select %p89, %s90, %s91
      %p95 = pneg %p89
      %p96 = scmp.eq.s32.totalorder %s12, 1
      %p97 = por %p95, %p96
      %p98 = scmp.ne.s32.totalorder %s90, %s93
      %p99 = scmp.eq.s32.totalorder %s12, 0
      %p100 = por %p98, %p99
      %p101 = scmp.ne.s32.totalorder %s90, %s93
      %p102 = scmp.eq.s32.totalorder %s17, 1
      %p103 = por %p101, %p102
      %p104 = scmp.ne.s32.totalorder %s93, %s94
      %p105 = scmp.eq.s32.totalorder %s17, 0
      %p106 = por %p104, %p105
      %p107 = scmp.ne.s32.totalorder %s93, %s94
      %p108 = scmp.eq.s32.totalorder %s18, 1
      %p109 = por %p107, %p108
      %p111 = scmp.ne.s32.totalorder %s94, %s110
      %p112 = scmp.eq.s32.totalorder %s18, 0
      %p113 = por %p111, %p112
      %p114 = scmp.le.s32.totalorder 1, %s12
      %p115 = scmp.lt.s32.totalorder %s12, 3
      %p116 = pnand %p114, %p115
      %p117 = pneg %p116
      // Predicated region
      $region9: #{unit3d_forward.3} parent=5 // pred_check
        _
      $region10: #{unit3d_forward.3} parent=5 // pred_check_branch
        %119 = sbr.rel (%p116) target = $region12
      $region11: #{unit3d_forward.3} parent=5 // pred_region
        %s120 = ssub.s32 %s12, 1
        // Predicated region
        $region13: #{unit3d_forward.3} parent=11 // pred_check
          %p121 = pneg %p59
        $region14: #{unit3d_forward.3} parent=11 // pred_check_branch
          %123 = sbr.rel (%p121) target = $region16
        $region15: #{unit3d_forward.3} parent=11 // pred_region
          _
        $region16: #{unit3d_forward.3} parent=11 // pred_fallthru
          _
        // Predicated region
        $region17: #{unit3d_forward.3} parent=11 // pred_check
          %p124 = pneg %p80
        $region18: #{unit3d_forward.3} parent=11 // pred_check_branch
          %126 = sbr.rel (%p124) target = $region20
        $region19: #{unit3d_forward.3} parent=11 // pred_region
          _
        $region20: #{unit3d_forward.3} parent=11 // pred_fallthru
          _
      $region12: #{unit3d_forward.3} parent=5 // pred_fallthru
        _
      %p127 = scmp.lt.s32.totalorder %s12, 2
      // Predicated region
      $region21: #{unit3d_forward.3} parent=5 // pred_check
        %p128 = pneg %p127
      $region22: #{unit3d_forward.3} parent=5 // pred_check_branch
        %130 = sbr.rel (%p128) target = $region24
      $region23: #{unit3d_forward.3} parent=5 // pred_region
        // Predicated region
        $region25: #{unit3d_forward.3} parent=23 // pred_check
          %p131 = pneg %p32
        $region26: #{unit3d_forward.3} parent=23 // pred_check_branch
          %133 = sbr.rel (%p131) target = $region28
        $region27: #{unit3d_forward.3} parent=23 // pred_region
          %s134 = smul.u32 32, %s12
          %p135 = scmp.lt.s32.totalorder %s134, 63
          %s136 = scalar_select %p135, %s134, 63
          %s137 = smul.addr %s136, 8
          %s138 = scalar_lea.vmem %s0, %s137
          %s139 = smul.u32 32, %s12
        $region28: #{unit3d_forward.3} parent=23 // pred_fallthru
          _
      $region24: #{unit3d_forward.3} parent=5 // pred_fallthru
        _
      %p140 = scmp.le.s32.totalorder 1, %s12
      %p141 = scmp.lt.s32.totalorder %s12, 3
      %p142 = pnand %p140, %p141
      %p143 = pneg %p142
      // Predicated region
      $region29: #{unit3d_forward.3} parent=5 // pred_check
        _
      $region30: #{unit3d_forward.3} parent=5 // pred_check_branch
        %145 = sbr.rel (%p142) target = $region32
      $region31: #{unit3d_forward.3} parent=5 // pred_region
        %s146 = ssub.s32 %s12, 1
        %s147 = smul.u32 32, %s17
        %p148 = scmp.lt.s32.totalorder %s147, 63
        %s149 = scalar_select %p148, %s147, 63
        %s150 = smul.addr %s149, 8
        %s151 = scalar_lea.vmem %s0, %s150
        %p152 = pneg %p38
        %p153 = pneg %p35
        %p154 = pneg %p59
        %p155 = pneg %p56
        %p156 = pneg %p80
        %p157 = pneg %p77
        %p158 = pneg %p106
        %p159 = pneg %p103
        %s160 = sand.u32 %s93, 1
        %s161 = scalar_lea.sflag [#allocation3], %s160
        %s162 = sand.u32 %s93, 1
        %s163 = smul.addr %s162, 256
        %s164 = scalar_lea.vmem [#allocation2], %s163
        %s165 = smul.u32 32, %s17
        %p166 = scmp.lt.s32.totalorder %s165, 63
        %s167 = scalar_select %p166, %s165, 63
        %s168 = smul.addr %s167, 8
        %s169 = scalar_lea.vmem %s0, %s168
        %s170 = smul.u32 32, %s17
        %s171 = smul.u32 32, %s17
        %v172 = vld [vmem:[%s169] sm:$0xff]
        %v173 = vld [vmem:[%s169 + $0x8] sm:$0xff]
        %v174 = vld [vmem:[%s169 + $0x10] sm:$0xff]
        %v175 = vld [vmem:[%s169 + $0x18] sm:$0xff]
        %v176 = vld [vmem:[%s169 + $0x20] sm:$0xff]
        %v177 = vld [vmem:[%s169 + $0x28] sm:$0xff]
        %v178 = vld [vmem:[%s169 + $0x30] sm:$0xff]
        %v179 = vld [vmem:[%s169 + $0x38] sm:$0xff]
        %v180 = vld [vmem:[%s169 + $0x40] sm:$0xff]
        %v181 = vld [vmem:[%s169 + $0x48] sm:$0xff]
        %v182 = vld [vmem:[%s169 + $0x50] sm:$0xff]
        %v183 = vld [vmem:[%s169 + $0x58] sm:$0xff]
        %v184 = vld [vmem:[%s169 + $0x60] sm:$0xff]
        %v185 = vld [vmem:[%s169 + $0x68] sm:$0xff]
        %v186 = vld [vmem:[%s169 + $0x70] sm:$0xff]
        %v187 = vld [vmem:[%s169 + $0x78] sm:$0xff]
        %v188 = vld [vmem:[%s169 + $0x80] sm:$0xff]
        %v189 = vld [vmem:[%s169 + $0x88] sm:$0xff]
        %v190 = vld [vmem:[%s169 + $0x90] sm:$0xff]
        %v191 = vld [vmem:[%s169 + $0x98] sm:$0xff]
        %v192 = vld [vmem:[%s169 + $0xa0] sm:$0xff]
        %v193 = vld [vmem:[%s169 + $0xa8] sm:$0xff]
        %v194 = vld [vmem:[%s169 + $0xb0] sm:$0xff]
        %v195 = vld [vmem:[%s169 + $0xb8] sm:$0xff]
        %v196 = vld [vmem:[%s169 + $0xc0] sm:$0xff]
        %v197 = vld [vmem:[%s169 + $0xc8] sm:$0xff]
        %v198 = vld [vmem:[%s169 + $0xd0] sm:$0xff]
        %v199 = vld [vmem:[%s169 + $0xd8] sm:$0xff]
        %v200 = vld [vmem:[%s169 + $0xe0] sm:$0xff]
        %v201 = vld [vmem:[%s169 + $0xe8] sm:$0xff]
        %v202 = vld [vmem:[%s169 + $0xf0] sm:$0xff]
        %v203 = vld [vmem:[%s169 + $0xf8] sm:$0xff]
        %v204 = vld [vmem:[%s1] sm:$0x1]
        %v206 = vlaneseq
        %v207 = vshrl.u32 %v206, 7
        %v208 = vsub.s32 0, %v207
        %v209 = vrot.slane %v204, %v208
        %v211 = vmul.f32 %v172, %v209
        %v212 = vmul.f32 %v173, %v209
        %v213 = vmul.f32 %v174, %v209
        %v214 = vmul.f32 %v175, %v209
        %v215 = vmul.f32 %v176, %v209
        %v216 = vmul.f32 %v177, %v209
        %v217 = vmul.f32 %v178, %v209
        %v218 = vmul.f32 %v179, %v209
        %v219 = vmul.f32 %v180, %v209
        %v220 = vmul.f32 %v181, %v209
        %v221 = vmul.f32 %v182, %v209
        %v222 = vmul.f32 %v183, %v209
        %v223 = vmul.f32 %v184, %v209
        %v224 = vmul.f32 %v185, %v209
        %v225 = vmul.f32 %v186, %v209
        %v226 = vmul.f32 %v187, %v209
        %v227 = vmul.f32 %v188, %v209
        %v228 = vmul.f32 %v189, %v209
        %v229 = vmul.f32 %v190, %v209
        %v230 = vmul.f32 %v191, %v209
        %v231 = vmul.f32 %v192, %v209
        %v232 = vmul.f32 %v193, %v209
        %v233 = vmul.f32 %v194, %v209
        %v234 = vmul.f32 %v195, %v209
        %v235 = vmul.f32 %v196, %v209
        %v236 = vmul.f32 %v197, %v209
        %v237 = vmul.f32 %v198, %v209
        %v238 = vmul.f32 %v199, %v209
        %v239 = vmul.f32 %v200, %v209
        %v240 = vmul.f32 %v201, %v209
        %v241 = vmul.f32 %v202, %v209
        %v242 = vmul.f32 %v203, %v209
        %v243 = vld [vmem:[%s2] sm:$0x1]
        %v245 = vlaneseq
        %v246 = vshrl.u32 %v245, 7
        %v247 = vsub.s32 0, %v246
        %v248 = vrot.slane %v243, %v247
        %v250 = vadd.f32 %v211, %v248
        %v251 = vadd.f32 %v212, %v248
        %v252 = vadd.f32 %v213, %v248
        %v253 = vadd.f32 %v214, %v248
        %v254 = vadd.f32 %v215, %v248
        %v255 = vadd.f32 %v216, %v248
        %v256 = vadd.f32 %v217, %v248
        %v257 = vadd.f32 %v218, %v248
        %v258 = vadd.f32 %v219, %v248
        %v259 = vadd.f32 %v220, %v248
        %v260 = vadd.f32 %v221, %v248
        %v261 = vadd.f32 %v222, %v248
        %v262 = vadd.f32 %v223, %v248
        %v263 = vadd.f32 %v224, %v248
        %v264 = vadd.f32 %v225, %v248
        %v265 = vadd.f32 %v226, %v248
        %v266 = vadd.f32 %v227, %v248
        %v267 = vadd.f32 %v228, %v248
        %v268 = vadd.f32 %v229, %v248
        %v269 = vadd.f32 %v230, %v248
        %v270 = vadd.f32 %v231, %v248
        %v271 = vadd.f32 %v232, %v248
        %v272 = vadd.f32 %v233, %v248
        %v273 = vadd.f32 %v234, %v248
        %v274 = vadd.f32 %v235, %v248
        %v275 = vadd.f32 %v236, %v248
        %v276 = vadd.f32 %v237, %v248
        %v277 = vadd.f32 %v238, %v248
        %v278 = vadd.f32 %v239, %v248
        %v279 = vadd.f32 %v240, %v248
        %v280 = vadd.f32 %v241, %v248
        %v281 = vadd.f32 %v242, %v248
        %v282 = vmax.f32 %v250, 0.0
        %v283 = vmax.f32 %v251, 0.0
        %v284 = vmax.f32 %v252, 0.0
        %v285 = vmax.f32 %v253, 0.0
        %v286 = vmax.f32 %v254, 0.0
        %v287 = vmax.f32 %v255, 0.0
        %v288 = vmax.f32 %v256, 0.0
        %v289 = vmax.f32 %v257, 0.0
        %v290 = vmax.f32 %v258, 0.0
        %v291 = vmax.f32 %v259, 0.0
        %v292 = vmax.f32 %v260, 0.0
        %v293 = vmax.f32 %v261, 0.0
        %v294 = vmax.f32 %v262, 0.0
        %v295 = vmax.f32 %v263, 0.0
        %v296 = vmax.f32 %v264, 0.0
        %v297 = vmax.f32 %v265, 0.0
        %v298 = vmax.f32 %v266, 0.0
        %v299 = vmax.f32 %v267, 0.0
        %v300 = vmax.f32 %v268, 0.0
        %v301 = vmax.f32 %v269, 0.0
        %v302 = vmax.f32 %v270, 0.0
        %v303 = vmax.f32 %v271, 0.0
        %v304 = vmax.f32 %v272, 0.0
        %v305 = vmax.f32 %v273, 0.0
        %v306 = vmax.f32 %v274, 0.0
        %v307 = vmax.f32 %v275, 0.0
        %v308 = vmax.f32 %v276, 0.0
        %v309 = vmax.f32 %v277, 0.0
        %v310 = vmax.f32 %v278, 0.0
        %v311 = vmax.f32 %v279, 0.0
        %v312 = vmax.f32 %v280, 0.0
        %v313 = vmax.f32 %v281, 0.0
        %314 = vst [vmem:[%s164] sm:$0xff] %v282
        %315 = vst [vmem:[%s164 + $0x8] sm:$0xff] %v283
        %316 = vst [vmem:[%s164 + $0x10] sm:$0xff] %v284
        %317 = vst [vmem:[%s164 + $0x18] sm:$0xff] %v285
        %318 = vst [vmem:[%s164 + $0x20] sm:$0xff] %v286
        %319 = vst [vmem:[%s164 + $0x28] sm:$0xff] %v287
        %320 = vst [vmem:[%s164 + $0x30] sm:$0xff] %v288
        %321 = vst [vmem:[%s164 + $0x38] sm:$0xff] %v289
        %322 = vst [vmem:[%s164 + $0x40] sm:$0xff] %v290
        %323 = vst [vmem:[%s164 + $0x48] sm:$0xff] %v291
        %324 = vst [vmem:[%s164 + $0x50] sm:$0xff] %v292
        %325 = vst [vmem:[%s164 + $0x58] sm:$0xff] %v293
        %326 = vst [vmem:[%s164 + $0x60] sm:$0xff] %v294
        %327 = vst [vmem:[%s164 + $0x68] sm:$0xff] %v295
        %328 = vst [vmem:[%s164 + $0x70] sm:$0xff] %v296
        %329 = vst [vmem:[%s164 + $0x78] sm:$0xff] %v297
        %330 = vst [vmem:[%s164 + $0x80] sm:$0xff] %v298
        %331 = vst [vmem:[%s164 + $0x88] sm:$0xff] %v299
        %332 = vst [vmem:[%s164 + $0x90] sm:$0xff] %v300
        %333 = vst [vmem:[%s164 + $0x98] sm:$0xff] %v301
        %334 = vst [vmem:[%s164 + $0xa0] sm:$0xff] %v302
        %335 = vst [vmem:[%s164 + $0xa8] sm:$0xff] %v303
        %336 = vst [vmem:[%s164 + $0xb0] sm:$0xff] %v304
        %337 = vst [vmem:[%s164 + $0xb8] sm:$0xff] %v305
        %338 = vst [vmem:[%s164 + $0xc0] sm:$0xff] %v306
        %339 = vst [vmem:[%s164 + $0xc8] sm:$0xff] %v307
        %340 = vst [vmem:[%s164 + $0xd0] sm:$0xff] %v308
        %341 = vst [vmem:[%s164 + $0xd8] sm:$0xff] %v309
        %342 = vst [vmem:[%s164 + $0xe0] sm:$0xff] %v310
        %343 = vst [vmem:[%s164 + $0xe8] sm:$0xff] %v311
        %344 = vst [vmem:[%s164 + $0xf0] sm:$0xff] %v312
        %345 = vst [vmem:[%s164 + $0xf8] sm:$0xff] %v313
        %s346 = sand.u32 %s93, 1
        %s347 = scalar_lea.sflag [#allocation3], %s346
        %s348 = sand.u32 %s93, 1
        %s349 = smul.addr %s348, 256
        %s350 = scalar_lea.vmem [#allocation2], %s349
        // Predicated region
        $region33: #{unit3d_forward.3} parent=31 // pred_check
          %p351 = pneg %p103
        $region34: #{unit3d_forward.3} parent=31 // pred_check_branch
          %353 = sbr.rel (%p351) target = $region36
        $region35: #{unit3d_forward.3} parent=31 // pred_region
          %s354 = smul.u32 32, %s17
          %s356 = ssub.s32 4096, 4096
          %357 = vsyncadd %s347, %s356
          %s358 = smul.addr %s354, 128
          %s359 = scalar_lea.hbm %s3, %s358
          %s360 = sshll.u32 %s350, 4
          %s361 = int_to_ptr.vmem [resolvable:$true] %s360
          %366 = dma.vmem_to_hbm [thread:$0]  %s361, 4096, %s359, %s347, 128, 128, 8
        $region36: #{unit3d_forward.3} parent=31 // pred_fallthru
          _
      $region32: #{unit3d_forward.3} parent=5 // pred_fallthru
        _
      %p367 = scmp.le.s32.totalorder 2, %s12
      // Predicated region
      $region37: #{unit3d_forward.3} parent=5 // pred_check
        %p368 = pneg %p367
      $region38: #{unit3d_forward.3} parent=5 // pred_check_branch
        %370 = sbr.rel (%p368) target = $region40
      $region39: #{unit3d_forward.3} parent=5 // pred_region
        %s371 = ssub.s32 %s12, 2
        // Predicated region
        $region41: #{unit3d_forward.3} parent=39 // pred_check
          %p372 = pneg %p109
        $region42: #{unit3d_forward.3} parent=39 // pred_check_branch
          %374 = sbr.rel (%p372) target = $region44
        $region43: #{unit3d_forward.3} parent=39 // pred_region
          %s375 = sand.u32 %s94, 1
          %s376 = scalar_lea.sflag [#allocation3], %s375
          %s377 = sand.u32 %s94, 1
          %s378 = smul.addr %s377, 256
          %s379 = scalar_lea.vmem [#allocation2], %s378
          %380 = dma.done %s376, 4096
        $region44: #{unit3d_forward.3} parent=39 // pred_fallthru
          _
      $region40: #{unit3d_forward.3} parent=5 // pred_fallthru
        _
    $region6: #{unit3d_forward.3} parent=1 // loop_footer
      %s16 = sadd.s32 1, %s12
    $region7: #{unit3d_forward.3} parent=1 // loop_footer_branch
      %11 = sbr.rel target = $region3
    $region8: #{unit3d_forward.3} parent=1 // loop_exit
      _
    %381 = vsyncpa [#allocation3], 1
    %s382 = scalar_lea.sflag [#allocation3], 1
    %383 = vsyncpa %s382, 1

// kernel: unit3d_forward.2
$region0: #{unit3d_forward.2}
  #allocation0 [shape = 'u32[]', space=smem, size = 0x4, offset = 0x4, fixed_abs, tag = 'smem constant byte address 0x4 - core index']
  #allocation1 [shape = 'u32[144,128]{1,0:T(1,128)}', space=vmem, size = 0x12000, scoped, tag = 'internal scratch']
  #allocation2 [shape = 'f32[256,128]{1,0:T(8,128)}', space=vmem, size = 0x20000, scoped, tag = 'scratch operand']
  %s0 = inlined_call_operand.vmem [shape: f32[512,128], index: 0, kind: input, shape index: {}]
  %s1 = inlined_call_operand.vmem [shape: f32[128,128], index: 1, kind: input, shape index: {}]
  %s2 = inlined_call_operand.vmem [shape: f32[512,128], index: 2, kind: output, shape index: {0}]
  %s3 = inlined_call_operand.vmem [shape: f32[2,8,128], index: 3, kind: output, shape index: {1}]
  %4 = xla_tuple %s2, %s3
  %s5 = sld [smem:[#allocation0]]
  $region57: #{unit3d_forward.2} parent=0
    _
  %s7 = ssub.s32 1, %s5
  %s8 = scalar_select 0, %s7, %s5
  loop: start=0, step=1, limit=4
  $region2: #{unit3d_forward.2} parent=0 // loop_pre_header
    _
  $region3: #{unit3d_forward.2} parent=0 // loop_header
    %s10 = sphi 0, %s14
    %p11 = scmp.ge.s32.totalorder %s10, 4
    %s17 = sphi 0, %s29
    %s18 = sphi 0, %s25
    %s19 = sphi 0, %s17
    %s20 = sphi 0, %s18
    %s21 = sphi 0, %s19
    %s22 = sphi 0, %s20
    %s34 = sphi 0, %s36
    %s37 = sphi 0, %s34
    %s38 = sphi 0, %s37
    %s54 = sphi 0, %s38
    %s60 = sphi 0, %s62
    %s63 = sphi 0, %s60
    %s64 = sphi 0, %s63
    %s80 = sphi 0, %s64
    %s86 = sphi 0, %s88
    %s89 = sphi 0, %s86
    %s90 = sphi 0, %s89
    %s106 = sphi 0, %s90
    %s112 = sphi 0, %s114
    %s115 = sphi 0, %s112
    %s116 = sphi 0, %s115
    %s132 = sphi 0, %s116
  $region4: #{unit3d_forward.2} parent=0 // loop_header_branch
    %13 = sbr.rel (%p11) target = $region8
  $region5: #{unit3d_forward.2} parent=0 // loop_body
    %s15 = ssub.s32 %s10, 1
    %s16 = ssub.s32 %s10, 2
    %s23 = sadd.s32 1, %s18
    %p24 = scmp.ge.s32.totalorder %s23, 1
    %s25 = scalar_select %p24, 0, %s23
    %s26 = sadd.s32 1, %s17
    %s27 = scalar_select %p24, %s26, %s17
    %p28 = scmp.ge.s32.totalorder %s27, 2
    %s29 = scalar_select %p28, 0, %s27
    %s30 = ssub.s32 %s17, %s29
    %s31 = ssub.s32 %s18, %s25
    %s32 = sor.u32 %s30, %s31
    %p33 = scmp.eq.s32.totalorder %s32, 0
    %s35 = sadd.s32 %s34, 1
    %s36 = scalar_select %p33, %s34, %s35
    %p39 = pneg %p33
    %p40 = scmp.eq.s32.totalorder %s10, 1
    %p41 = por %p39, %p40
    %p42 = scmp.ne.s32.totalorder %s34, %s37
    %p43 = scmp.eq.s32.totalorder %s10, 0
    %p44 = por %p42, %p43
    %p45 = scmp.ne.s32.totalorder %s34, %s37
    %p46 = scmp.eq.s32.totalorder %s15, 1
    %p47 = por %p45, %p46
    %p48 = scmp.ne.s32.totalorder %s37, %s38
    %p49 = scmp.eq.s32.totalorder %s15, 0
    %p50 = por %p48, %p49
    %p51 = scmp.ne.s32.totalorder %s37, %s38
    %p52 = scmp.eq.s32.totalorder %s16, 1
    %p53 = por %p51, %p52
    %p55 = scmp.ne.s32.totalorder %s38, %s54
    %p56 = scmp.eq.s32.totalorder %s16, 0
    %p57 = por %p55, %p56
    %s58 = ssub.s32 %s18, %s25
    %p59 = scmp.eq.s32.totalorder %s58, 0
    %s61 = sadd.s32 %s60, 1
    %s62 = scalar_select %p59, %s60, %s61
    %p65 = pneg %p59
    %p66 = scmp.eq.s32.totalorder %s10, 1
    %p67 = por %p65, %p66
    %p68 = scmp.ne.s32.totalorder %s60, %s63
    %p69 = scmp.eq.s32.totalorder %s10, 0
    %p70 = por %p68, %p69
    %p71 = scmp.ne.s32.totalorder %s60, %s63
    %p72 = scmp.eq.s32.totalorder %s15, 1
    %p73 = por %p71, %p72
    %p74 = scmp.ne.s32.totalorder %s63, %s64
    %p75 = scmp.eq.s32.totalorder %s15, 0
    %p76 = por %p74, %p75
    %p77 = scmp.ne.s32.totalorder %s63, %s64
    %p78 = scmp.eq.s32.totalorder %s16, 1
    %p79 = por %p77, %p78
    %p81 = scmp.ne.s32.totalorder %s64, %s80
    %p82 = scmp.eq.s32.totalorder %s16, 0
    %p83 = por %p81, %p82
    %s84 = ssub.s32 %s17, %s29
    %p85 = scmp.eq.s32.totalorder %s84, 0
    %s87 = sadd.s32 %s86, 1
    %s88 = scalar_select %p85, %s86, %s87
    %p91 = pneg %p85
    %p92 = scmp.eq.s32.totalorder %s10, 1
    %p93 = por %p91, %p92
    %p94 = scmp.ne.s32.totalorder %s86, %s89
    %p95 = scmp.eq.s32.totalorder %s10, 0
    %p96 = por %p94, %p95
    %p97 = scmp.ne.s32.totalorder %s86, %s89
    %p98 = scmp.eq.s32.totalorder %s15, 1
    %p99 = por %p97, %p98
    %p100 = scmp.ne.s32.totalorder %s89, %s90
    %p101 = scmp.eq.s32.totalorder %s15, 0
    %p102 = por %p100, %p101
    %p103 = scmp.ne.s32.totalorder %s89, %s90
    %p104 = scmp.eq.s32.totalorder %s16, 1
    %p105 = por %p103, %p104
    %p107 = scmp.ne.s32.totalorder %s90, %s106
    %p108 = scmp.eq.s32.totalorder %s16, 0
    %p109 = por %p107, %p108
    %s110 = ssub.s32 %s17, %s29
    %p111 = scmp.eq.s32.totalorder %s110, 0
    %s113 = sadd.s32 %s112, 1
    %s114 = scalar_select %p111, %s112, %s113
    %p117 = pneg %p111
    %p118 = scmp.eq.s32.totalorder %s10, 1
    %p119 = por %p117, %p118
    %p120 = scmp.ne.s32.totalorder %s112, %s115
    %p121 = scmp.eq.s32.totalorder %s10, 0
    %p122 = por %p120, %p121
    %p123 = scmp.ne.s32.totalorder %s112, %s115
    %p124 = scmp.eq.s32.totalorder %s15, 1
    %p125 = por %p123, %p124
    %p126 = scmp.ne.s32.totalorder %s115, %s116
    %p127 = scmp.eq.s32.totalorder %s15, 0
    %p128 = por %p126, %p127
    %p129 = scmp.ne.s32.totalorder %s115, %s116
    %p130 = scmp.eq.s32.totalorder %s16, 1
    %p131 = por %p129, %p130
    %p133 = scmp.ne.s32.totalorder %s116, %s132
    %p134 = scmp.eq.s32.totalorder %s16, 0
    %p135 = por %p133, %p134
    %p136 = scmp.le.s32.totalorder 1, %s10
    %p137 = scmp.lt.s32.totalorder %s10, 3
    %p138 = pnand %p136, %p137
    %p139 = pneg %p138
    // Predicated region
    $region9: #{unit3d_forward.2} parent=5 // pred_check
      _
    $region10: #{unit3d_forward.2} parent=5 // pred_check_branch
      %141 = sbr.rel (%p138) target = $region12
    $region11: #{unit3d_forward.2} parent=5 // pred_region
      %s142 = ssub.s32 %s10, 1
      // Predicated region
      $region13: #{unit3d_forward.2} parent=11 // pred_check
        %p143 = pneg %p76
      $region14: #{unit3d_forward.2} parent=11 // pred_check_branch
        %145 = sbr.rel (%p143) target = $region16
      $region15: #{unit3d_forward.2} parent=11 // pred_region
        %s146 = smul.u32 16, %s20
        %p147 = scmp.lt.s32.totalorder %s146, 15
        %s148 = scalar_select %p147, %s146, 15
        %s149 = smul.addr %s148, 8
        %s150 = scalar_lea.vmem %s1, %s149
        %s151 = smul.u32 16, %s20
      $region16: #{unit3d_forward.2} parent=11 // pred_fallthru
        _
    $region12: #{unit3d_forward.2} parent=5 // pred_fallthru
      _
    %p152 = scmp.lt.s32.totalorder %s10, 2
    // Predicated region
    $region17: #{unit3d_forward.2} parent=5 // pred_check
      %p153 = pneg %p152
    $region18: #{unit3d_forward.2} parent=5 // pred_check_branch
      %155 = sbr.rel (%p153) target = $region20
    $region19: #{unit3d_forward.2} parent=5 // pred_region
      // Predicated region
      $region21: #{unit3d_forward.2} parent=19 // pred_check
        %p156 = pneg %p44
      $region22: #{unit3d_forward.2} parent=19 // pred_check_branch
        %158 = sbr.rel (%p156) target = $region24
      $region23: #{unit3d_forward.2} parent=19 // pred_region
        %s159 = smul.u32 32, %s17
        %p160 = scmp.lt.s32.totalorder %s159, 63
        %s161 = scalar_select %p160, %s159, 63
        %p162 = scmp.lt.s32.totalorder %s18, 0
        %s163 = scalar_select %p162, %s18, 0
        %s164 = sadd.s32 %s163, %s161
        %s165 = smul.addr %s164, 8
        %s166 = scalar_lea.vmem %s0, %s165
        %s167 = smul.u32 32, %s17
      $region24: #{unit3d_forward.2} parent=19 // pred_fallthru
        _
    $region20: #{unit3d_forward.2} parent=5 // pred_fallthru
      _
    %p168 = scmp.le.s32.totalorder 1, %s10
    %p169 = scmp.lt.s32.totalorder %s10, 3
    %p170 = pnand %p168, %p169
    %p171 = pneg %p170
    // Predicated region
    $region25: #{unit3d_forward.2} parent=5 // pred_check
      _
    $region26: #{unit3d_forward.2} parent=5 // pred_check_branch
      %173 = sbr.rel (%p170) target = $region28
    $region27: #{unit3d_forward.2} parent=5 // pred_region
      %s174 = ssub.s32 %s10, 1
      %s175 = smul.u32 32, %s19
      %p176 = scmp.lt.s32.totalorder %s175, 63
      %s177 = scalar_select %p176, %s175, 63
      %p178 = scmp.lt.s32.totalorder %s20, 0
      %s179 = scalar_select %p178, %s20, 0
      %s180 = sadd.s32 %s179, %s177
      %s181 = smul.addr %s180, 8
      %s182 = scalar_lea.vmem %s0, %s181
      %p183 = pneg %p50
      %p184 = pneg %p47
      %s185 = smul.u32 16, %s20
      %p186 = scmp.lt.s32.totalorder %s185, 15
      %s187 = scalar_select %p186, %s185, 15
      %s188 = smul.addr %s187, 8
      %s189 = scalar_lea.vmem %s1, %s188
      %p190 = pneg %p76
      %p191 = pneg %p73
      %p192 = pneg %p102
      %p193 = pneg %p99
      %s194 = smul.u32 32, %s19
      %p195 = scmp.lt.s32.totalorder %s194, 63
      %s196 = scalar_select %p195, %s194, 63
      %s197 = smul.addr %s196, 8
      %s198 = scalar_lea.vmem %s2, %s197
      %p199 = pneg %p128
      %p200 = pneg %p125
      %p201 = scmp.lt.s32.totalorder %s19, 1
      %s202 = scalar_select %p201, %s19, 1
      %s203 = smul.addr %s202, 8
      %s204 = scalar_lea.vmem %s3, %s203
      %s205 = smul.u32 32, %s19
      %p206 = scmp.lt.s32.totalorder %s205, 63
      %s207 = scalar_select %p206, %s205, 63
      %p208 = scmp.lt.s32.totalorder %s20, 0
      %s209 = scalar_select %p208, %s20, 0
      %s210 = sadd.s32 %s209, %s207
      %s211 = smul.addr %s210, 8
      %s212 = scalar_lea.vmem %s0, %s211
      %s213 = smul.u32 32, %s19
      %s214 = smul.u32 16, %s20
      %p215 = scmp.lt.s32.totalorder %s214, 15
      %s216 = scalar_select %p215, %s214, 15
      %s217 = smul.addr %s216, 8
      %s218 = scalar_lea.vmem %s1, %s217
      %s219 = smul.u32 16, %s20
      %s220 = smul.u32 32, %s19
      %p221 = scmp.lt.s32.totalorder %s220, 63
      %s222 = scalar_select %p221, %s220, 63
      %s223 = smul.addr %s222, 8
      %s224 = scalar_lea.vmem %s2, %s223
      %s225 = smul.u32 32, %s19
      %p226 = scmp.lt.s32.totalorder %s19, 1
      %s227 = scalar_select %p226, %s19, 1
      %s228 = smul.addr %s227, 8
      %s229 = scalar_lea.vmem %s3, %s228
      %p230 = scmp.eq.s32.totalorder %s20, 0
      // Predicated region
      $region29: #{unit3d_forward.2} parent=27 // pred_check
        %p231 = pneg %p230
      $region30: #{unit3d_forward.2} parent=27 // pred_check_branch
        %233 = sbr.rel (%p231) target = $region32
      $region31: #{unit3d_forward.2} parent=27 // pred_region
        %234 = vst [vmem:[#allocation2] sm:$0xff] 0.0
        %235 = vst [vmem:[#allocation2 + $0x8] sm:$0xff] 0.0
        %236 = vst [vmem:[#allocation2 + $0x10] sm:$0xff] 0.0
        %237 = vst [vmem:[#allocation2 + $0x18] sm:$0xff] 0.0
        %238 = vst [vmem:[#allocation2 + $0x20] sm:$0xff] 0.0
        %239 = vst [vmem:[#allocation2 + $0x28] sm:$0xff] 0.0
        %240 = vst [vmem:[#allocation2 + $0x30] sm:$0xff] 0.0
        %241 = vst [vmem:[#allocation2 + $0x38] sm:$0xff] 0.0
        %242 = vst [vmem:[#allocation2 + $0x40] sm:$0xff] 0.0
        %243 = vst [vmem:[#allocation2 + $0x48] sm:$0xff] 0.0
        %244 = vst [vmem:[#allocation2 + $0x50] sm:$0xff] 0.0
        %245 = vst [vmem:[#allocation2 + $0x58] sm:$0xff] 0.0
        %246 = vst [vmem:[#allocation2 + $0x60] sm:$0xff] 0.0
        %247 = vst [vmem:[#allocation2 + $0x68] sm:$0xff] 0.0
        %248 = vst [vmem:[#allocation2 + $0x70] sm:$0xff] 0.0
        %249 = vst [vmem:[#allocation2 + $0x78] sm:$0xff] 0.0
        %250 = vst [vmem:[#allocation2 + $0x80] sm:$0xff] 0.0
        %251 = vst [vmem:[#allocation2 + $0x88] sm:$0xff] 0.0
        %252 = vst [vmem:[#allocation2 + $0x90] sm:$0xff] 0.0
        %253 = vst [vmem:[#allocation2 + $0x98] sm:$0xff] 0.0
        %254 = vst [vmem:[#allocation2 + $0xa0] sm:$0xff] 0.0
        %255 = vst [vmem:[#allocation2 + $0xa8] sm:$0xff] 0.0
        %256 = vst [vmem:[#allocation2 + $0xb0] sm:$0xff] 0.0
        %257 = vst [vmem:[#allocation2 + $0xb8] sm:$0xff] 0.0
        %258 = vst [vmem:[#allocation2 + $0xc0] sm:$0xff] 0.0
        %259 = vst [vmem:[#allocation2 + $0xc8] sm:$0xff] 0.0
        %260 = vst [vmem:[#allocation2 + $0xd0] sm:$0xff] 0.0
        %261 = vst [vmem:[#allocation2 + $0xd8] sm:$0xff] 0.0
        %262 = vst [vmem:[#allocation2 + $0xe0] sm:$0xff] 0.0
        %263 = vst [vmem:[#allocation2 + $0xe8] sm:$0xff] 0.0
        %264 = vst [vmem:[#allocation2 + $0xf0] sm:$0xff] 0.0
        %265 = vst [vmem:[#allocation2 + $0xf8] sm:$0xff] 0.0
      $region32: #{unit3d_forward.2} parent=27 // pred_fallthru
        _
      %v266 = vld [vmem:[#allocation2] sm:$0xff]
      %v267 = vld [vmem:[#allocation2 + $0x8] sm:$0xff]
      %v268 = vld [vmem:[#allocation2 + $0x10] sm:$0xff]
      %v269 = vld [vmem:[#allocation2 + $0x18] sm:$0xff]
      %v270 = vld [vmem:[#allocation2 + $0x20] sm:$0xff]
      %v271 = vld [vmem:[#allocation2 + $0x28] sm:$0xff]
      %v272 = vld [vmem:[#allocation2 + $0x30] sm:$0xff]
      %v273 = vld [vmem:[#allocation2 + $0x38] sm:$0xff]
      %v274 = vld [vmem:[#allocation2 + $0x40] sm:$0xff]
      %v275 = vld [vmem:[#allocation2 + $0x48] sm:$0xff]
      %v276 = vld [vmem:[#allocation2 + $0x50] sm:$0xff]
      %v277 = vld [vmem:[#allocation2 + $0x58] sm:$0xff]
      %v278 = vld [vmem:[#allocation2 + $0x60] sm:$0xff]
      %v279 = vld [vmem:[#allocation2 + $0x68] sm:$0xff]
      %v280 = vld [vmem:[#allocation2 + $0x70] sm:$0xff]
      %v281 = vld [vmem:[#allocation2 + $0x78] sm:$0xff]
      %v282 = vld [vmem:[#allocation2 + $0x80] sm:$0xff]
      %v283 = vld [vmem:[#allocation2 + $0x88] sm:$0xff]
      %v284 = vld [vmem:[#allocation2 + $0x90] sm:$0xff]
      %v285 = vld [vmem:[#allocation2 + $0x98] sm:$0xff]
      %v286 = vld [vmem:[#allocation2 + $0xa0] sm:$0xff]
      %v287 = vld [vmem:[#allocation2 + $0xa8] sm:$0xff]
      %v288 = vld [vmem:[#allocation2 + $0xb0] sm:$0xff]
      %v289 = vld [vmem:[#allocation2 + $0xb8] sm:$0xff]
      %v290 = vld [vmem:[#allocation2 + $0xc0] sm:$0xff]
      %v291 = vld [vmem:[#allocation2 + $0xc8] sm:$0xff]
      %v292 = vld [vmem:[#allocation2 + $0xd0] sm:$0xff]
      %v293 = vld [vmem:[#allocation2 + $0xd8] sm:$0xff]
      %v294 = vld [vmem:[#allocation2 + $0xe0] sm:$0xff]
      %v295 = vld [vmem:[#allocation2 + $0xe8] sm:$0xff]
      %v296 = vld [vmem:[#allocation2 + $0xf0] sm:$0xff]
      %v297 = vld [vmem:[#allocation2 + $0xf8] sm:$0xff]
      %v298 = vld [vmem:[%s212] sm:$0xff]
      %v299 = vld [vmem:[%s212 + $0x8] sm:$0xff]
      %v300 = vld [vmem:[%s212 + $0x10] sm:$0xff]
      %v301 = vld [vmem:[%s212 + $0x18] sm:$0xff]
      %v302 = vld [vmem:[%s212 + $0x20] sm:$0xff]
      %v303 = vld [vmem:[%s212 + $0x28] sm:$0xff]
      %v304 = vld [vmem:[%s212 + $0x30] sm:$0xff]
      %v305 = vld [vmem:[%s212 + $0x38] sm:$0xff]
      %v306 = vld [vmem:[%s212 + $0x40] sm:$0xff]
      %v307 = vld [vmem:[%s212 + $0x48] sm:$0xff]
      %v308 = vld [vmem:[%s212 + $0x50] sm:$0xff]
      %v309 = vld [vmem:[%s212 + $0x58] sm:$0xff]
      %v310 = vld [vmem:[%s212 + $0x60] sm:$0xff]
      %v311 = vld [vmem:[%s212 + $0x68] sm:$0xff]
      %v312 = vld [vmem:[%s212 + $0x70] sm:$0xff]
      %v313 = vld [vmem:[%s212 + $0x78] sm:$0xff]
      %v314 = vld [vmem:[%s212 + $0x80] sm:$0xff]
      %v315 = vld [vmem:[%s212 + $0x88] sm:$0xff]
      %v316 = vld [vmem:[%s212 + $0x90] sm:$0xff]
      %v317 = vld [vmem:[%s212 + $0x98] sm:$0xff]
      %v318 = vld [vmem:[%s212 + $0xa0] sm:$0xff]
      %v319 = vld [vmem:[%s212 + $0xa8] sm:$0xff]
      %v320 = vld [vmem:[%s212 + $0xb0] sm:$0xff]
      %v321 = vld [vmem:[%s212 + $0xb8] sm:$0xff]
      %v322 = vld [vmem:[%s212 + $0xc0] sm:$0xff]
      %v323 = vld [vmem:[%s212 + $0xc8] sm:$0xff]
      %v324 = vld [vmem:[%s212 + $0xd0] sm:$0xff]
      %v325 = vld [vmem:[%s212 + $0xd8] sm:$0xff]
      %v326 = vld [vmem:[%s212 + $0xe0] sm:$0xff]
      %v327 = vld [vmem:[%s212 + $0xe8] sm:$0xff]
      %v328 = vld [vmem:[%s212 + $0xf0] sm:$0xff]
      %v329 = vld [vmem:[%s212 + $0xf8] sm:$0xff]
      %v330 = vld [vmem:[%s218] sm:$0xff]
      %v331 = vld [vmem:[%s218 + $0x8] sm:$0xff]
      %v332 = vld [vmem:[%s218 + $0x10] sm:$0xff]
      %v333 = vld [vmem:[%s218 + $0x18] sm:$0xff]
      %v334 = vld [vmem:[%s218 + $0x20] sm:$0xff]
      %v335 = vld [vmem:[%s218 + $0x28] sm:$0xff]
      %v336 = vld [vmem:[%s218 + $0x30] sm:$0xff]
      %v337 = vld [vmem:[%s218 + $0x38] sm:$0xff]
      %v338 = vld [vmem:[%s218 + $0x40] sm:$0xff]
      %v339 = vld [vmem:[%s218 + $0x48] sm:$0xff]
      %v340 = vld [vmem:[%s218 + $0x50] sm:$0xff]
      %v341 = vld [vmem:[%s218 + $0x58] sm:$0xff]
      %v342 = vld [vmem:[%s218 + $0x60] sm:$0xff]
      %v343 = vld [vmem:[%s218 + $0x68] sm:$0xff]
      %v344 = vld [vmem:[%s218 + $0x70] sm:$0xff]
      %v345 = vld [vmem:[%s218 + $0x78] sm:$0xff]
      %346 = vmatprep.subr.mxu0 0.0
      %347 = vmatpush1.msra.mxu0 %v345
      %348 = vmatprep.subr.mxu0 0.0
      %349 = vmatpush1.msra.mxu0 %v344
      %350 = vmatprep.subr.mxu0 0.0
      %351 = vmatpush1.msra.mxu0 %v343
      %352 = vmatprep.subr.mxu0 0.0
      %353 = vmatpush1.msra.mxu0 %v342
      %354 = vmatprep.subr.mxu0 0.0
      %355 = vmatpush1.msra.mxu0 %v341
      %356 = vmatprep.subr.mxu0 0.0
      %357 = vmatpush1.msra.mxu0 %v340
      %358 = vmatprep.subr.mxu0 0.0
      %359 = vmatpush1.msra.mxu0 %v339
      %360 = vmatprep.subr.mxu0 0.0
      %361 = vmatpush1.msra.mxu0 %v338
      %362 = vmatprep.subr.mxu0 0.0
      %363 = vmatpush1.msra.mxu0 %v337
      %364 = vmatprep.subr.mxu0 0.0
      %365 = vmatpush1.msra.mxu0 %v336
      %366 = vmatprep.subr.mxu0 0.0
      %367 = vmatpush1.msra.mxu0 %v335
      %368 = vmatprep.subr.mxu0 0.0
      %369 = vmatpush1.msra.mxu0 %v334
      %370 = vmatprep.subr.mxu0 0.0
      %371 = vmatpush1.msra.mxu0 %v333
      %372 = vmatprep.subr.mxu0 0.0
      %373 = vmatpush1.msra.mxu0 %v332
      %374 = vmatprep.subr.mxu0 0.0
      %375 = vmatpush1.msra.mxu0 %v331
      %376 = vmatprep.subr.mxu0 0.0
      %377 = vmatpush1.msra.mxu0 %v330
      %378 = vmatprep.subr.mxu0 0.0
      %379 = vmatpush2.msra.mxu0 0.0
      %380 = vmatprep.subr.mxu0 0.0
      %381 = vmatpush2.msra.mxu0 0.0
      %382 = vmatprep.subr.mxu0 0.0
      %383 = vmatpush2.msra.mxu0 0.0
      %384 = vmatprep.subr.mxu0 0.0
      %385 = vmatpush2.msra.mxu0 0.0
      %386 = vmatprep.subr.mxu0 0.0
      %387 = vmatpush2.msra.mxu0 0.0
      %388 = vmatprep.subr.mxu0 0.0
      %389 = vmatpush2.msra.mxu0 0.0
      %390 = vmatprep.subr.mxu0 0.0
      %391 = vmatpush2.msra.mxu0 0.0
      %392 = vmatprep.subr.mxu0 0.0
      %393 = vmatpush2.msra.mxu0 0.0
      %394 = vmatprep.subr.mxu0 0.0
      %395 = vmatpush2.msra.mxu0 0.0
      %396 = vmatprep.subr.mxu0 0.0
      %397 = vmatpush2.msra.mxu0 0.0
      %398 = vmatprep.subr.mxu0 0.0
      %399 = vmatpush2.msra.mxu0 0.0
      %400 = vmatprep.subr.mxu0 0.0
      %401 = vmatpush2.msra.mxu0 0.0
      %402 = vmatprep.subr.mxu0 0.0
      %403 = vmatpush2.msra.mxu0 0.0
      %404 = vmatprep.subr.mxu0 0.0
      %405 = vmatpush2.msra.mxu0 0.0
      %406 = vmatprep.subr.mxu0 0.0
      %407 = vmatpush2.msra.mxu0 0.0
      %408 = vmatprep.subr.mxu0 0.0
      %409 = vmatpush2.msra.mxu0 0.0
      %410 = vmatprep.mubr.f32.mxu0 0.0
      %411 = vmatmul.mubr.f32.gmra.mxu0 %v298
      %v412 = vpop.f32.mrf.mxu0
      %v413 = vadd.f32 0.0, %v412
      %v414 = vpop.f32.mrf.mxu0
      %415 = vmatprep.mubr.f32.mxu0 0.0
      %416 = vmatmul.mubr.f32.gmra.mxu0 %v299
      %v417 = vpop.f32.mrf.mxu0
      %v418 = vadd.f32 0.0, %v417
      %v419 = vpop.f32.mrf.mxu0
      %420 = vmatprep.mubr.f32.mxu0 0.0
      %421 = vmatmul.mubr.f32.gmra.mxu0 %v300
      %v422 = vpop.f32.mrf.mxu0
      %v423 = vadd.f32 0.0, %v422
      %v424 = vpop.f32.mrf.mxu0
      %425 = vmatprep.mubr.f32.mxu0 0.0
      %426 = vmatmul.mubr.f32.gmra.mxu0 %v301
      %v427 = vpop.f32.mrf.mxu0
      %v428 = vadd.f32 0.0, %v427
      %v429 = vpop.f32.mrf.mxu0
      %430 = vmatprep.mubr.f32.mxu0 0.0
      %431 = vmatmul.mubr.f32.gmra.mxu0 %v302
      %v432 = vpop.f32.mrf.mxu0
      %v433 = vadd.f32 0.0, %v432
      %v434 = vpop.f32.mrf.mxu0
      %435 = vmatprep.mubr.f32.mxu0 0.0
      %436 = vmatmul.mubr.f32.gmra.mxu0 %v303
      %v437 = vpop.f32.mrf.mxu0
      %v438 = vadd.f32 0.0, %v437
      %v439 = vpop.f32.mrf.mxu0
      %440 = vmatprep.mubr.f32.mxu0 0.0
      %441 = vmatmul.mubr.f32.gmra.mxu0 %v304
      %v442 = vpop.f32.mrf.mxu0
      %v443 = vadd.f32 0.0, %v442
      %v444 = vpop.f32.mrf.mxu0
      %445 = vmatprep.mubr.f32.mxu0 0.0
      %446 = vmatmul.mubr.f32.gmra.mxu0 %v305
      %v447 = vpop.f32.mrf.mxu0
      %v448 = vadd.f32 0.0, %v447
      %v449 = vpop.f32.mrf.mxu0
      %450 = vmatprep.mubr.f32.mxu0 0.0
      %451 = vmatmul.mubr.f32.gmra.mxu0 %v306
      %v452 = vpop.f32.mrf.mxu0
      %v453 = vadd.f32 0.0, %v452
      %v454 = vpop.f32.mrf.mxu0
      %455 = vmatprep.mubr.f32.mxu0 0.0
      %456 = vmatmul.mubr.f32.gmra.mxu0 %v307
      %v457 = vpop.f32.mrf.mxu0
      %v458 = vadd.f32 0.0, %v457
      %v459 = vpop.f32.mrf.mxu0
      %460 = vmatprep.mubr.f32.mxu0 0.0
      %461 = vmatmul.mubr.f32.gmra.mxu0 %v308
      %v462 = vpop.f32.mrf.mxu0
      %v463 = vadd.f32 0.0, %v462
      %v464 = vpop.f32.mrf.mxu0
      %465 = vmatprep.mubr.f32.mxu0 0.0
      %466 = vmatmul.mubr.f32.gmra.mxu0 %v309
      %v467 = vpop.f32.mrf.mxu0
      %v468 = vadd.f32 0.0, %v467
      %v469 = vpop.f32.mrf.mxu0
      %470 = vmatprep.mubr.f32.mxu0 0.0
      %471 = vmatmul.mubr.f32.gmra.mxu0 %v310
      %v472 = vpop.f32.mrf.mxu0
      %v473 = vadd.f32 0.0, %v472
      %v474 = vpop.f32.mrf.mxu0
      %475 = vmatprep.mubr.f32.mxu0 0.0
      %476 = vmatmul.mubr.f32.gmra.mxu0 %v311
      %v477 = vpop.f32.mrf.mxu0
      %v478 = vadd.f32 0.0, %v477
      %v479 = vpop.f32.mrf.mxu0
      %480 = vmatprep.mubr.f32.mxu0 0.0
      %481 = vmatmul.mubr.f32.gmra.mxu0 %v312
      %v482 = vpop.f32.mrf.mxu0
      %v483 = vadd.f32 0.0, %v482
      %v484 = vpop.f32.mrf.mxu0
      %485 = vmatprep.mubr.f32.mxu0 0.0
      %486 = vmatmul.mubr.f32.gmra.mxu0 %v313
      %v487 = vpop.f32.mrf.mxu0
      %v488 = vadd.f32 0.0, %v487
      %v489 = vpop.f32.mrf.mxu0
      %490 = vmatprep.mubr.f32.mxu0 0.0
      %491 = vmatmul.mubr.f32.gmra.mxu0 %v314
      %v492 = vpop.f32.mrf.mxu0
      %v493 = vadd.f32 0.0, %v492
      %v494 = vpop.f32.mrf.mxu0
      %495 = vmatprep.mubr.f32.mxu0 0.0
      %496 = vmatmul.mubr.f32.gmra.mxu0 %v315
      %v497 = vpop.f32.mrf.mxu0
      %v498 = vadd.f32 0.0, %v497
      %v499 = vpop.f32.mrf.mxu0
      %500 = vmatprep.mubr.f32.mxu0 0.0
      %501 = vmatmul.mubr.f32.gmra.mxu0 %v316
      %v502 = vpop.f32.mrf.mxu0
      %v503 = vadd.f32 0.0, %v502
      %v504 = vpop.f32.mrf.mxu0
      %505 = vmatprep.mubr.f32.mxu0 0.0
      %506 = vmatmul.mubr.f32.gmra.mxu0 %v317
      %v507 = vpop.f32.mrf.mxu0
      %v508 = vadd.f32 0.0, %v507
      %v509 = vpop.f32.mrf.mxu0
      %510 = vmatprep.mubr.f32.mxu0 0.0
      %511 = vmatmul.mubr.f32.gmra.mxu0 %v318
      %v512 = vpop.f32.mrf.mxu0
      %v513 = vadd.f32 0.0, %v512
      %v514 = vpop.f32.mrf.mxu0
      %515 = vmatprep.mubr.f32.mxu0 0.0
      %516 = vmatmul.mubr.f32.gmra.mxu0 %v319
      %v517 = vpop.f32.mrf.mxu0
      %v518 = vadd.f32 0.0, %v517
      %v519 = vpop.f32.mrf.mxu0
      %520 = vmatprep.mubr.f32.mxu0 0.0
      %521 = vmatmul.mubr.f32.gmra.mxu0 %v320
      %v522 = vpop.f32.mrf.mxu0
      %v523 = vadd.f32 0.0, %v522
      %v524 = vpop.f32.mrf.mxu0
      %525 = vmatprep.mubr.f32.mxu0 0.0
      %526 = vmatmul.mubr.f32.gmra.mxu0 %v321
      %v527 = vpop.f32.mrf.mxu0
      %v528 = vadd.f32 0.0, %v527
      %v529 = vpop.f32.mrf.mxu0
      %530 = vmatprep.mubr.f32.mxu0 0.0
      %531 = vmatmul.mubr.f32.gmra.mxu0 %v322
      %v532 = vpop.f32.mrf.mxu0
      %v533 = vadd.f32 0.0, %v532
      %v534 = vpop.f32.mrf.mxu0
      %535 = vmatprep.mubr.f32.mxu0 0.0
      %536 = vmatmul.mubr.f32.gmra.mxu0 %v323
      %v537 = vpop.f32.mrf.mxu0
      %v538 = vadd.f32 0.0, %v537
      %v539 = vpop.f32.mrf.mxu0
      %540 = vmatprep.mubr.f32.mxu0 0.0
      %541 = vmatmul.mubr.f32.gmra.mxu0 %v324
      %v542 = vpop.f32.mrf.mxu0
      %v543 = vadd.f32 0.0, %v542
      %v544 = vpop.f32.mrf.mxu0
      %545 = vmatprep.mubr.f32.mxu0 0.0
      %546 = vmatmul.mubr.f32.gmra.mxu0 %v325
      %v547 = vpop.f32.mrf.mxu0
      %v548 = vadd.f32 0.0, %v547
      %v549 = vpop.f32.mrf.mxu0
      %550 = vmatprep.mubr.f32.mxu0 0.0
      %551 = vmatmul.mubr.f32.gmra.mxu0 %v326
      %v552 = vpop.f32.mrf.mxu0
      %v553 = vadd.f32 0.0, %v552
      %v554 = vpop.f32.mrf.mxu0
      %555 = vmatprep.mubr.f32.mxu0 0.0
      %556 = vmatmul.mubr.f32.gmra.mxu0 %v327
      %v557 = vpop.f32.mrf.mxu0
      %v558 = vadd.f32 0.0, %v557
      %v559 = vpop.f32.mrf.mxu0
      %560 = vmatprep.mubr.f32.mxu0 0.0
      %561 = vmatmul.mubr.f32.gmra.mxu0 %v328
      %v562 = vpop.f32.mrf.mxu0
      %v563 = vadd.f32 0.0, %v562
      %v564 = vpop.f32.mrf.mxu0
      %565 = vmatprep.mubr.f32.mxu0 0.0
      %566 = vmatmul.mubr.f32.gmra.mxu0 %v329
      %v567 = vpop.f32.mrf.mxu0
      %v568 = vadd.f32 0.0, %v567
      %v569 = vpop.f32.mrf.mxu0
      %570 = vdwg.mxu0
      %v571 = vadd.f32 %v266, %v413
      %v572 = vadd.f32 %v267, %v418
      %v573 = vadd.f32 %v268, %v423
      %v574 = vadd.f32 %v269, %v428
      %v575 = vadd.f32 %v270, %v433
      %v576 = vadd.f32 %v271, %v438
      %v577 = vadd.f32 %v272, %v443
      %v578 = vadd.f32 %v273, %v448
      %v579 = vadd.f32 %v274, %v453
      %v580 = vadd.f32 %v275, %v458
      %v581 = vadd.f32 %v276, %v463
      %v582 = vadd.f32 %v277, %v468
      %v583 = vadd.f32 %v278, %v473
      %v584 = vadd.f32 %v279, %v478
      %v585 = vadd.f32 %v280, %v483
      %v586 = vadd.f32 %v281, %v488
      %v587 = vadd.f32 %v282, %v493
      %v588 = vadd.f32 %v283, %v498
      %v589 = vadd.f32 %v284, %v503
      %v590 = vadd.f32 %v285, %v508
      %v591 = vadd.f32 %v286, %v513
      %v592 = vadd.f32 %v287, %v518
      %v593 = vadd.f32 %v288, %v523
      %v594 = vadd.f32 %v289, %v528
      %v595 = vadd.f32 %v290, %v533
      %v596 = vadd.f32 %v291, %v538
      %v597 = vadd.f32 %v292, %v543
      %v598 = vadd.f32 %v293, %v548
      %v599 = vadd.f32 %v294, %v553
      %v600 = vadd.f32 %v295, %v558
      %v601 = vadd.f32 %v296, %v563
      %v602 = vadd.f32 %v297, %v568
      %603 = vst [vmem:[#allocation2] sm:$0xff] %v571
      %604 = vst [vmem:[#allocation2 + $0x8] sm:$0xff] %v572
      %605 = vst [vmem:[#allocation2 + $0x10] sm:$0xff] %v573
      %606 = vst [vmem:[#allocation2 + $0x18] sm:$0xff] %v574
      %607 = vst [vmem:[#allocation2 + $0x20] sm:$0xff] %v575
      %608 = vst [vmem:[#allocation2 + $0x28] sm:$0xff] %v576
      %609 = vst [vmem:[#allocation2 + $0x30] sm:$0xff] %v577
      %610 = vst [vmem:[#allocation2 + $0x38] sm:$0xff] %v578
      %611 = vst [vmem:[#allocation2 + $0x40] sm:$0xff] %v579
      %612 = vst [vmem:[#allocation2 + $0x48] sm:$0xff] %v580
      %613 = vst [vmem:[#allocation2 + $0x50] sm:$0xff] %v581
      %614 = vst [vmem:[#allocation2 + $0x58] sm:$0xff] %v582
      %615 = vst [vmem:[#allocation2 + $0x60] sm:$0xff] %v583
      %616 = vst [vmem:[#allocation2 + $0x68] sm:$0xff] %v584
      %617 = vst [vmem:[#allocation2 + $0x70] sm:$0xff] %v585
      %618 = vst [vmem:[#allocation2 + $0x78] sm:$0xff] %v586
      %619 = vst [vmem:[#allocation2 + $0x80] sm:$0xff] %v587
      %620 = vst [vmem:[#allocation2 + $0x88] sm:$0xff] %v588
      %621 = vst [vmem:[#allocation2 + $0x90] sm:$0xff] %v589
      %622 = vst [vmem:[#allocation2 + $0x98] sm:$0xff] %v590
      %623 = vst [vmem:[#allocation2 + $0xa0] sm:$0xff] %v591
      %624 = vst [vmem:[#allocation2 + $0xa8] sm:$0xff] %v592
      %625 = vst [vmem:[#allocation2 + $0xb0] sm:$0xff] %v593
      %626 = vst [vmem:[#allocation2 + $0xb8] sm:$0xff] %v594
      %627 = vst [vmem:[#allocation2 + $0xc0] sm:$0xff] %v595
      %628 = vst [vmem:[#allocation2 + $0xc8] sm:$0xff] %v596
      %629 = vst [vmem:[#allocation2 + $0xd0] sm:$0xff] %v597
      %630 = vst [vmem:[#allocation2 + $0xd8] sm:$0xff] %v598
      %631 = vst [vmem:[#allocation2 + $0xe0] sm:$0xff] %v599
      %632 = vst [vmem:[#allocation2 + $0xe8] sm:$0xff] %v600
      %633 = vst [vmem:[#allocation2 + $0xf0] sm:$0xff] %v601
      %634 = vst [vmem:[#allocation2 + $0xf8] sm:$0xff] %v602
      // Predicated region
      $region33: #{unit3d_forward.2} parent=27 // pred_check
        %p635 = pneg %p230
      $region34: #{unit3d_forward.2} parent=27 // pred_check_branch
        %637 = sbr.rel (%p635) target = $region36
      $region35: #{unit3d_forward.2} parent=27 // pred_region
        %v638 = vld [vmem:[#allocation2] sm:$0xff]
        %v639 = vld [vmem:[#allocation2 + $0x8] sm:$0xff]
        %v640 = vld [vmem:[#allocation2 + $0x10] sm:$0xff]
        %v641 = vld [vmem:[#allocation2 + $0x18] sm:$0xff]
        %v642 = vld [vmem:[#allocation2 + $0x20] sm:$0xff]
        %v643 = vld [vmem:[#allocation2 + $0x28] sm:$0xff]
        %v644 = vld [vmem:[#allocation2 + $0x30] sm:$0xff]
        %v645 = vld [vmem:[#allocation2 + $0x38] sm:$0xff]
        %v646 = vld [vmem:[#allocation2 + $0x40] sm:$0xff]
        %v647 = vld [vmem:[#allocation2 + $0x48] sm:$0xff]
        %v648 = vld [vmem:[#allocation2 + $0x50] sm:$0xff]
        %v649 = vld [vmem:[#allocation2 + $0x58] sm:$0xff]
        %v650 = vld [vmem:[#allocation2 + $0x60] sm:$0xff]
        %v651 = vld [vmem:[#allocation2 + $0x68] sm:$0xff]
        %v652 = vld [vmem:[#allocation2 + $0x70] sm:$0xff]
        %v653 = vld [vmem:[#allocation2 + $0x78] sm:$0xff]
        %v654 = vld [vmem:[#allocation2 + $0x80] sm:$0xff]
        %v655 = vld [vmem:[#allocation2 + $0x88] sm:$0xff]
        %v656 = vld [vmem:[#allocation2 + $0x90] sm:$0xff]
        %v657 = vld [vmem:[#allocation2 + $0x98] sm:$0xff]
        %v658 = vld [vmem:[#allocation2 + $0xa0] sm:$0xff]
        %v659 = vld [vmem:[#allocation2 + $0xa8] sm:$0xff]
        %v660 = vld [vmem:[#allocation2 + $0xb0] sm:$0xff]
        %v661 = vld [vmem:[#allocation2 + $0xb8] sm:$0xff]
        %v662 = vld [vmem:[#allocation2 + $0xc0] sm:$0xff]
        %v663 = vld [vmem:[#allocation2 + $0xc8] sm:$0xff]
        %v664 = vld [vmem:[#allocation2 + $0xd0] sm:$0xff]
        %v665 = vld [vmem:[#allocation2 + $0xd8] sm:$0xff]
        %v666 = vld [vmem:[#allocation2 + $0xe0] sm:$0xff]
        %v667 = vld [vmem:[#allocation2 + $0xe8] sm:$0xff]
        %v668 = vld [vmem:[#allocation2 + $0xf0] sm:$0xff]
        %v669 = vld [vmem:[#allocation2 + $0xf8] sm:$0xff]
        %670 = vst [vmem:[%s224] sm:$0xff] %v638
        %671 = vst [vmem:[%s224 + $0x8] sm:$0xff] %v639
        %672 = vst [vmem:[%s224 + $0x10] sm:$0xff] %v640
        %673 = vst [vmem:[%s224 + $0x18] sm:$0xff] %v641
        %674 = vst [vmem:[%s224 + $0x20] sm:$0xff] %v642
        %675 = vst [vmem:[%s224 + $0x28] sm:$0xff] %v643
        %676 = vst [vmem:[%s224 + $0x30] sm:$0xff] %v644
        %677 = vst [vmem:[%s224 + $0x38] sm:$0xff] %v645
        %678 = vst [vmem:[%s224 + $0x40] sm:$0xff] %v646
        %679 = vst [vmem:[%s224 + $0x48] sm:$0xff] %v647
        %680 = vst [vmem:[%s224 + $0x50] sm:$0xff] %v648
        %681 = vst [vmem:[%s224 + $0x58] sm:$0xff] %v649
        %682 = vst [vmem:[%s224 + $0x60] sm:$0xff] %v650
        %683 = vst [vmem:[%s224 + $0x68] sm:$0xff] %v651
        %684 = vst [vmem:[%s224 + $0x70] sm:$0xff] %v652
        %685 = vst [vmem:[%s224 + $0x78] sm:$0xff] %v653
        %686 = vst [vmem:[%s224 + $0x80] sm:$0xff] %v654
        %687 = vst [vmem:[%s224 + $0x88] sm:$0xff] %v655
        %688 = vst [vmem:[%s224 + $0x90] sm:$0xff] %v656
        %689 = vst [vmem:[%s224 + $0x98] sm:$0xff] %v657
        %690 = vst [vmem:[%s224 + $0xa0] sm:$0xff] %v658
        %691 = vst [vmem:[%s224 + $0xa8] sm:$0xff] %v659
        %692 = vst [vmem:[%s224 + $0xb0] sm:$0xff] %v660
        %693 = vst [vmem:[%s224 + $0xb8] sm:$0xff] %v661
        %694 = vst [vmem:[%s224 + $0xc0] sm:$0xff] %v662
        %695 = vst [vmem:[%s224 + $0xc8] sm:$0xff] %v663
        %696 = vst [vmem:[%s224 + $0xd0] sm:$0xff] %v664
        %697 = vst [vmem:[%s224 + $0xd8] sm:$0xff] %v665
        %698 = vst [vmem:[%s224 + $0xe0] sm:$0xff] %v666
        %699 = vst [vmem:[%s224 + $0xe8] sm:$0xff] %v667
        %700 = vst [vmem:[%s224 + $0xf0] sm:$0xff] %v668
        %701 = vst [vmem:[%s224 + $0xf8] sm:$0xff] %v669
        %v702 = vadd.f32 %v638, %v639
        %v703 = vadd.f32 %v702, %v640
        %v704 = vadd.f32 %v703, %v641
        %v705 = vadd.f32 %v704, %v642
        %v706 = vadd.f32 %v705, %v643
        %v707 = vadd.f32 %v706, %v644
        %v708 = vadd.f32 %v707, %v645
        %v709 = vadd.f32 %v708, %v646
        %v710 = vadd.f32 %v709, %v647
        %v711 = vadd.f32 %v710, %v648
        %v712 = vadd.f32 %v711, %v649
        %v713 = vadd.f32 %v712, %v650
        %v714 = vadd.f32 %v713, %v651
        %v715 = vadd.f32 %v714, %v652
        %v716 = vadd.f32 %v715, %v653
        %v717 = vadd.f32 %v716, %v654
        %v718 = vadd.f32 %v717, %v655
        %v719 = vadd.f32 %v718, %v656
        %v720 = vadd.f32 %v719, %v657
        %v721 = vadd.f32 %v720, %v658
        %v722 = vadd.f32 %v721, %v659
        %v723 = vadd.f32 %v722, %v660
        %v724 = vadd.f32 %v723, %v661
        %v725 = vadd.f32 %v724, %v662
        %v726 = vadd.f32 %v725, %v663
        %v727 = vadd.f32 %v726, %v664
        %v728 = vadd.f32 %v727, %v665
        %v729 = vadd.f32 %v728, %v666
        %v730 = vadd.f32 %v729, %v667
        %v731 = vadd.f32 %v730, %v668
        %v732 = vadd.f32 %v731, %v669
        %v733 = vrot.slane %v732, 4
        %v734 = vadd.f32 %v732, %v733
        %v735 = vrot.slane %v734, 2
        %v736 = vadd.f32 %v734, %v735
        %v737 = vrot.slane %v736, 1
        %v738 = vadd.f32 %v736, %v737
        %v739 = vmul.f32 %v638, %v638
        %v740 = vmul.f32 %v639, %v639
        %v741 = vmul.f32 %v640, %v640
        %v742 = vmul.f32 %v641, %v641
        %v743 = vmul.f32 %v642, %v642
        %v744 = vmul.f32 %v643, %v643
        %v745 = vmul.f32 %v644, %v644
        %v746 = vmul.f32 %v645, %v645
        %v747 = vmul.f32 %v646, %v646
        %v748 = vmul.f32 %v647, %v647
        %v749 = vmul.f32 %v648, %v648
        %v750 = vmul.f32 %v649, %v649
        %v751 = vmul.f32 %v650, %v650
        %v752 = vmul.f32 %v651, %v651
        %v753 = vmul.f32 %v652, %v652
        %v754 = vmul.f32 %v653, %v653
        %v755 = vmul.f32 %v654, %v654
        %v756 = vmul.f32 %v655, %v655
        %v757 = vmul.f32 %v656, %v656
        %v758 = vmul.f32 %v657, %v657
        %v759 = vmul.f32 %v658, %v658
        %v760 = vmul.f32 %v659, %v659
        %v761 = vmul.f32 %v660, %v660
        %v762 = vmul.f32 %v661, %v661
        %v763 = vmul.f32 %v662, %v662
        %v764 = vmul.f32 %v663, %v663
        %v765 = vmul.f32 %v664, %v664
        %v766 = vmul.f32 %v665, %v665
        %v767 = vmul.f32 %v666, %v666
        %v768 = vmul.f32 %v667, %v667
        %v769 = vmul.f32 %v668, %v668
        %v770 = vmul.f32 %v669, %v669
        %v771 = vadd.f32 %v739, %v740
        %v772 = vadd.f32 %v771, %v741
        %v773 = vadd.f32 %v772, %v742
        %v774 = vadd.f32 %v773, %v743
        %v775 = vadd.f32 %v774, %v744
        %v776 = vadd.f32 %v775, %v745
        %v777 = vadd.f32 %v776, %v746
        %v778 = vadd.f32 %v777, %v747
        %v779 = vadd.f32 %v778, %v748
        %v780 = vadd.f32 %v779, %v749
        %v781 = vadd.f32 %v780, %v750
        %v782 = vadd.f32 %v781, %v751
        %v783 = vadd.f32 %v782, %v752
        %v784 = vadd.f32 %v783, %v753
        %v785 = vadd.f32 %v784, %v754
        %v786 = vadd.f32 %v785, %v755
        %v787 = vadd.f32 %v786, %v756
        %v788 = vadd.f32 %v787, %v757
        %v789 = vadd.f32 %v788, %v758
        %v790 = vadd.f32 %v789, %v759
        %v791 = vadd.f32 %v790, %v760
        %v792 = vadd.f32 %v791, %v761
        %v793 = vadd.f32 %v792, %v762
        %v794 = vadd.f32 %v793, %v763
        %v795 = vadd.f32 %v794, %v764
        %v796 = vadd.f32 %v795, %v765
        %v797 = vadd.f32 %v796, %v766
        %v798 = vadd.f32 %v797, %v767
        %v799 = vadd.f32 %v798, %v768
        %v800 = vadd.f32 %v799, %v769
        %v801 = vadd.f32 %v800, %v770
        %v802 = vrot.slane %v801, 4
        %v803 = vadd.f32 %v801, %v802
        %v804 = vrot.slane %v803, 2
        %v805 = vadd.f32 %v803, %v804
        %v806 = vrot.slane %v805, 1
        %v807 = vadd.f32 %v805, %v806
        %v808 = vlaneseq
        %v809 = vshrl.u32 %v808, 7
        %vm810 = vcmp.eq.s32.totalorder %v809, 0
        %vm811 = vcmp.eq.s32.totalorder %v809, 1
        %v812 = vsel %vm811, %v807, 0.0
        %v813 = vsel %vm810, %v738, %v812
        %814 = vst [vmem:[%s229] sm:$0xff] %v813
      $region36: #{unit3d_forward.2} parent=27 // pred_fallthru
        _
      %s815 = smul.u32 32, %s19
      %p816 = scmp.lt.s32.totalorder %s815, 63
      %s817 = scalar_select %p816, %s815, 63
      %s818 = smul.addr %s817, 8
      %s819 = scalar_lea.vmem %s2, %s818
      %p820 = scmp.lt.s32.totalorder %s19, 1
      %s821 = scalar_select %p820, %s19, 1
      %s822 = smul.addr %s821, 8
      %s823 = scalar_lea.vmem %s3, %s822
      // Predicated region
      $region37: #{unit3d_forward.2} parent=27 // pred_check
        %p824 = pneg %p99
      $region38: #{unit3d_forward.2} parent=27 // pred_check_branch
        %826 = sbr.rel (%p824) target = $region40
      $region39: #{unit3d_forward.2} parent=27 // pred_region
        %s827 = smul.u32 32, %s19
      $region40: #{unit3d_forward.2} parent=27 // pred_fallthru
        _
      // Predicated region
      $region41: #{unit3d_forward.2} parent=27 // pred_check
        %p828 = pneg %p125
      $region42: #{unit3d_forward.2} parent=27 // pred_check_branch
        %830 = sbr.rel (%p828) target = $region44
      $region43: #{unit3d_forward.2} parent=27 // pred_region
        _
      $region44: #{unit3d_forward.2} parent=27 // pred_fallthru
        _
    $region28: #{unit3d_forward.2} parent=5 // pred_fallthru
      _
    %p831 = scmp.le.s32.totalorder 2, %s10
    // Predicated region
    $region45: #{unit3d_forward.2} parent=5 // pred_check
      %p832 = pneg %p831
    $region46: #{unit3d_forward.2} parent=5 // pred_check_branch
      %834 = sbr.rel (%p832) target = $region48
    $region47: #{unit3d_forward.2} parent=5 // pred_region
      %s835 = ssub.s32 %s10, 2
      // Predicated region
      $region49: #{unit3d_forward.2} parent=47 // pred_check
        %p836 = pneg %p105
      $region50: #{unit3d_forward.2} parent=47 // pred_check_branch
        %838 = sbr.rel (%p836) target = $region52
      $region51: #{unit3d_forward.2} parent=47 // pred_region
        %s839 = smul.u32 32, %s21
        %p840 = scmp.lt.s32.totalorder %s839, 63
        %s841 = scalar_select %p840, %s839, 63
        %s842 = smul.addr %s841, 8
        %s843 = scalar_lea.vmem %s2, %s842
      $region52: #{unit3d_forward.2} parent=47 // pred_fallthru
        _
      // Predicated region
      $region53: #{unit3d_forward.2} parent=47 // pred_check
        %p844 = pneg %p131
      $region54: #{unit3d_forward.2} parent=47 // pred_check_branch
        %846 = sbr.rel (%p844) target = $region56
      $region55: #{unit3d_forward.2} parent=47 // pred_region
        %p847 = scmp.lt.s32.totalorder %s21, 1
        %s848 = scalar_select %p847, %s21, 1
        %s849 = smul.addr %s848, 8
        %s850 = scalar_lea.vmem %s3, %s849
      $region56: #{unit3d_forward.2} parent=47 // pred_fallthru
        _
    $region48: #{unit3d_forward.2} parent=5 // pred_fallthru
      _
  $region6: #{unit3d_forward.2} parent=0 // loop_footer
    %s14 = sadd.s32 1, %s10
  $region7: #{unit3d_forward.2} parent=0 // loop_footer_branch
    %9 = sbr.rel target = $region3
  $region8: #{unit3d_forward.2} parent=0 // loop_exit
    _

</llo_original>
